<compile_context>
chip_gen: v5e
topology: v5e:2x2
jax: 0.10.0
libtpu: 0.0.40
codegen_flags: <defaults>
</compile_context>

<pallas_src>
import jax
import jax.numpy as jnp
from jax.experimental import pallas as pl
from jax.experimental.pallas import tpu as pltpu

NUM_INFEATURE = 64   # stand-in for list(model.children())[-1].in_features
COUT_PAD = 128       # conv output channels zero-padded to a lane-dense 128
HIDDEN = 256
NUM_CLASSES = 2


# ---------------------------------------------------------------------------
# Fused Pallas kernel: conv3x3 -> ReLU -> global avg pool -> fc -> ReLU ->
#                      Dropout(eval) -> Linear -> LogSoftmax
# ---------------------------------------------------------------------------
def _make_fused_kernel(H, W, CIN):
    HW = H * W
    inv_hw = 1.0 / float(HW)

    def kernel(x_ref, wc_ref, w1_ref, b1_ref, w2_ref, b2_ref, o_ref):
        # x_ref : (1, H+2, W+2, CIN) bf16   one zero-padded NHWC image
        # wc_ref: (9, CIN, COUT_PAD)  bf16  3x3 conv weight, taps major, Cout padded
        # w1_ref: (COUT_PAD, HIDDEN)  f32 ; b1_ref: (1, HIDDEN) f32
        # w2_ref: (HIDDEN, NUM_CLASSES) f32; b2_ref: (1, NUM_CLASSES) f32
        # o_ref : (1, 1, NUM_CLASSES) f32
        xw = x_ref[0].astype(jnp.float32)                     # (H+2, W+2, CIN)

        # 3x3 conv as 9 shifted matmuls, f32 accumulation (no im2col in HBM).
        # NOTE: K = CIN is tiny at demo scale; real ResNet stages have CIN >= 64.
        acc = jnp.zeros((HW, COUT_PAD), jnp.float32)
        for di in range(3):
            for dj in range(3):
                patch = xw[di:di + H, dj:dj + W, :].reshape(HW, CIN)
                acc = acc + jnp.dot(patch.astype(jnp.bfloat16),
                                    wc_ref[di * 3 + dj],
                                    preferred_element_type=jnp.float32)

        acc = jnp.maximum(acc, 0.0)                           # ReLU
        pooled = jnp.sum(acc, axis=0, keepdims=True) * inv_hw  # global avg pool, f32

        # self.fc : Linear(num_infeature, 256)   (padded channels carry zero weights)
        h = jnp.dot(pooled, w1_ref[...], preferred_element_type=jnp.float32) + b1_ref[...]
        # classifier[0] : ReLU
        h = jnp.maximum(h, 0.0)
        # classifier[1] : Dropout(0.5)
        # TODO(synk): Dropout is identity (eval semantics); training mode would use
        #             pltpu.prng_seed / pltpu.prng_random_bits masking.
        # classifier[2] : Linear(256, 2)
        logits = jnp.dot(h, w2_ref[...], preferred_element_type=jnp.float32) + b2_ref[...]
        # classifier[3] : LogSoftmax(dim=1), numerically stabilized, f32
        m = jnp.max(logits, axis=-1, keepdims=True)
        z = logits - m
        lse = jnp.log(jnp.sum(jnp.exp(z), axis=-1, keepdims=True))
        o_ref[0] = z - lse

    return kernel


# ---------------------------------------------------------------------------
# Wrapper
# ---------------------------------------------------------------------------
def resnet_pre_net_forward(x, packed):
    """x: (N, Cin, H, W) f32 NCHW.  packed: prepacked params.  Returns (N, 2) f32."""
    n, cin, h, w = x.shape
    # NCHW -> NHWC, zero-pad spatially for the 3x3/stride-1/pad-1 conv, cast conv
    # path to bf16 (halves HBM traffic; accumulation stays f32 inside the kernel).
    xp = jnp.pad(jnp.transpose(x, (0, 2, 3, 1)),
                 ((0, 0), (1, 1), (1, 1), (0, 0))).astype(jnp.bfloat16)

    kernel = _make_fused_kernel(h, w, cin)

    conv_flops = 2 * n * h * w * 9 * cin * COUT_PAD
    head_flops = 2 * n * (COUT_PAD * HIDDEN + HIDDEN * NUM_CLASSES)
    bytes_accessed = (xp.size * 2 + packed["w_conv"].size * 2
                      + packed["w1"].size * 4 + packed["b1"].size * 4
                      + packed["w2"].size * 4 + packed["b2"].size * 4
                      + n * NUM_CLASSES * 4)

    # TODO(synk): for very large feature maps, add a second ("arbitrary") grid axis that
    #             tiles H with a 2-row halo and accumulates the pool in a VMEM scratch.
    out = pl.pallas_call(
        kernel,
        out_shape=jax.ShapeDtypeStruct((n, 1, NUM_CLASSES), jnp.float32),
        grid_spec=pltpu.PrefetchScalarGridSpec(
            num_scalar_prefetch=0,
            grid=(n,),
            in_specs=[
                # one padded image per grid step -> auto double-buffered across the batch
                pl.BlockSpec((1, h + 2, w + 2, cin), lambda i: (i, 0, 0, 0)),
                # weights / biases: constant index_map -> resident in VMEM for the grid
                pl.BlockSpec((9, cin, COUT_PAD), lambda i: (0, 0, 0)),
                pl.BlockSpec((COUT_PAD, HIDDEN), lambda i: (0, 0)),
                pl.BlockSpec((1, HIDDEN), lambda i: (0, 0)),
                pl.BlockSpec((HIDDEN, NUM_CLASSES), lambda i: (0, 0)),
                pl.BlockSpec((1, NUM_CLASSES), lambda i: (0, 0)),
            ],
            out_specs=pl.BlockSpec((1, 1, NUM_CLASSES), lambda i: (i, 0, 0)),
        ),
        compiler_params=pltpu.CompilerParams(
            dimension_semantics=("parallel",),       # shards the batch over 2 TCs on v7x
            vmem_limit_bytes=32 * 1024 * 1024,       # explicit, safe on v5e/v6e/v7x
        ),
        cost_estimate=pl.CostEstimate(
            flops=int(conv_flops + head_flops),
            transcendentals=int(n * (NUM_CLASSES + 1)),
            bytes_accessed=int(bytes_accessed),
        ),
    )(xp, packed["w_conv"], packed["w1"], packed["b1"], packed["w2"], packed["b2"])
    return out[:, 0, :]


# ---------------------------------------------------------------------------
# Parameter init + one-time prepack (transpose / pad / cast outside the forward)
# ---------------------------------------------------------------------------
def init_params(key, in_ch):
    k1, k2, k3, k4, k5 = jax.random.split(key, 5)
    return {
        # backbone stand-in conv (resnet convs have no bias)
        "conv_w": 0.1 * jax.random.normal(k1, (NUM_INFEATURE, in_ch, 3, 3), jnp.float32),
        # self.fc = nn.Linear(num_infeature, 256)  (stored as (in, out))
        "fc_w": 0.05 * jax.random.normal(k2, (NUM_INFEATURE, HIDDEN), jnp.float32),
        "fc_b": 0.01 * jax.random.normal(k3, (1, HIDDEN), jnp.float32),
        # classifier Linear(256, 2)
        "cls_w": 0.05 * jax.random.normal(k4, (HIDDEN, NUM_CLASSES), jnp.float32),
        "cls_b": 0.01 * jax.random.normal(k5, (1, NUM_CLASSES), jnp.float32),
    }


def prepack_params(params):
    cout, cin, _, _ = params["conv_w"].shape
    # (Cout, Cin, 3, 3) -> (3, 3, Cin, Cout) -> (9, Cin, Cout), pad Cout -> 128 lanes, bf16.
    wc = jnp.transpose(params["conv_w"], (2, 3, 1, 0)).reshape(9, cin, cout)
    wc = jnp.pad(wc, ((0, 0), (0, 0), (0, COUT_PAD - cout))).astype(jnp.bfloat16)
    # fc weight: zero rows for the (dead) padded channels; head weights stay f32
    # (tiny, VMEM-resident, keeps the pooled-feature path fully f32).
    w1 = jnp.pad(params["fc_w"], ((0, COUT_PAD - cout), (0, 0)))
    return {"w_conv": wc, "w1": w1, "b1": params["fc_b"],
            "w2": params["cls_w"], "b2": params["cls_b"]}


# ---------------------------------------------------------------------------
# Plain-JAX reference (same math, for correctness check)
# ---------------------------------------------------------------------------
def reference_forward(x, packed):
    xp = jnp.pad(jnp.transpose(x, (0, 2, 3, 1)),
                 ((0, 0), (1, 1), (1, 1), (0, 0))).astype(jnp.bfloat16).astype(jnp.float32)
    n, hp, wp, _ = xp.shape
    h, w = hp - 2, wp - 2
    wc = packed["w_conv"].astype(jnp.float32)
    acc = jnp.zeros((n, h, w, COUT_PAD), jnp.float32)
    for di in range(3):
        for dj in range(3):
            acc = acc + jnp.einsum("nhwc,cd->nhwd",
                                   xp[:, di:di + h, dj:dj + w, :], wc[di * 3 + dj])
    acc = jnp.maximum(acc, 0.0)
    pooled = jnp.mean(acc, axis=(1, 2))
    hid = jnp.maximum(pooled @ packed["w1"] + packed["b1"], 0.0)
    logits = hid @ packed["w2"] + packed["b2"]
    return jax.nn.log_softmax(logits, axis=-1)


if __name__ == "__main__":
    key = jax.random.PRNGKey(0)
    kx, kp = jax.random.split(key)
    x = jax.random.normal(kx, (2, 4, 16, 16), jnp.float32)   # NCHW
    params = init_params(kp, in_ch=4)
    packed = prepack_params(params)

    fwd = jax.jit(resnet_pre_net_forward)
    out = jax.block_until_ready(fwd(x, packed))

    assert out.shape == (2, NUM_CLASSES)
    # log-softmax rows must exponentiate to ~1
    assert bool(jnp.allclose(jnp.sum(jnp.exp(out), axis=1), 1.0, atol=1e-4))
    # matches the plain-JAX reference of the same math
    ref = reference_forward(x, packed)
    assert bool(jnp.allclose(out, ref, atol=2e-2, rtol=2e-2))
    print("KERNEL_OK")
</pallas_src>

<mosaic_0001>
module attributes {stable_mosaic.version = 11 : i64} {
  func.func @kernel(%arg0: i32, %arg1: memref<1x18x18x4xbf16, #tpu.memory_space<vmem>>, %arg2: memref<9x4x128xbf16, #tpu.memory_space<vmem>>, %arg3: memref<128x256xf32, #tpu.memory_space<vmem>>, %arg4: memref<1x256xf32, #tpu.memory_space<vmem>>, %arg5: memref<256x2xf32, #tpu.memory_space<vmem>>, %arg6: memref<1x2xf32, #tpu.memory_space<vmem>>, %arg7: memref<1x1x2xf32, #tpu.memory_space<vmem>>) attributes {dimension_semantics = [#tpu.dimension_semantics<parallel>], iteration_bounds = array<i64: 2>, scalar_prefetch = 0 : i64, scratch_operands = 0 : i64, tpu.core_type = #tpu.core_type<tc>, window_params = [{transform_indices = @transform_0, window_bounds = array<i64: 1, 18, 18, 4>}, {pipeline_mode = #tpu.pipeline_mode<synchronous>, transform_indices = @transform_1, window_bounds = array<i64: 9, 4, 128>}, {pipeline_mode = #tpu.pipeline_mode<synchronous>, transform_indices = @transform_2, window_bounds = array<i64: 128, 256>}, {pipeline_mode = #tpu.pipeline_mode<synchronous>, transform_indices = @transform_3, window_bounds = array<i64: 1, 256>}, {pipeline_mode = #tpu.pipeline_mode<synchronous>, transform_indices = @transform_4, window_bounds = array<i64: 256, 2>}, {pipeline_mode = #tpu.pipeline_mode<synchronous>, transform_indices = @transform_5, window_bounds = array<i64: 1, 2>}, {transform_indices = @transform_6, window_bounds = array<i64: 1, 1, 2>}]} {
    %c0 = arith.constant 0 : index
    %c0_0 = arith.constant 0 : index
    %c0_1 = arith.constant 0 : index
    %c0_2 = arith.constant 0 : index
    %0 = vector.load %arg1[%c0, %c0_0, %c0_1, %c0_2] : memref<1x18x18x4xbf16, #tpu.memory_space<vmem>>, vector<1x18x18x4xbf16>
    %1 = vector.shape_cast %0 : vector<1x18x18x4xbf16> to vector<18x18x4xbf16>
    %2 = arith.extf %1 : vector<18x18x4xbf16> to vector<18x18x4xf32>
    %cst = arith.constant 0.000000e+00 : f32
    %3 = vector.broadcast %cst : f32 to vector<256x128xf32>
    %4 = vector.extract_strided_slice %2 {offsets = [0, 0, 0], sizes = [16, 16, 4], strides = [1, 1, 1]} : vector<18x18x4xf32> to vector<16x16x4xf32>
    %5 = vector.shape_cast %4 : vector<16x16x4xf32> to vector<256x4xf32>
    %6 = arith.truncf %5 : vector<256x4xf32> to vector<256x4xbf16>
    %c0_3 = arith.constant 0 : index
    %c0_4 = arith.constant 0 : index
    %c0_5 = arith.constant 0 : index
    %7 = vector.load %arg2[%c0_3, %c0_4, %c0_5] : memref<9x4x128xbf16, #tpu.memory_space<vmem>>, vector<1x4x128xbf16>
    %8 = vector.shape_cast %7 : vector<1x4x128xbf16> to vector<4x128xbf16>
    %cst_6 = arith.constant dense<0.000000e+00> : vector<256x128xf32>
    %9 = tpu.matmul %6, %8, %cst_6 {dimension_numbers = #tpu.dot_dimension_numbers<[1], [0], [0], [1], [0, 0, 1, 1], [], []>} : vector<256x4xbf16>, vector<4x128xbf16>, vector<256x128xf32> -> vector<256x128xf32>
    %10 = arith.addf %3, %9 : vector<256x128xf32>
    %11 = vector.extract_strided_slice %2 {offsets = [0, 1, 0], sizes = [16, 16, 4], strides = [1, 1, 1]} : vector<18x18x4xf32> to vector<16x16x4xf32>
    %12 = vector.shape_cast %11 : vector<16x16x4xf32> to vector<256x4xf32>
    %13 = arith.truncf %12 : vector<256x4xf32> to vector<256x4xbf16>
    %c1 = arith.constant 1 : index
    %c0_7 = arith.constant 0 : index
    %c0_8 = arith.constant 0 : index
    %14 = vector.load %arg2[%c1, %c0_7, %c0_8] : memref<9x4x128xbf16, #tpu.memory_space<vmem>>, vector<1x4x128xbf16>
    %15 = vector.shape_cast %14 : vector<1x4x128xbf16> to vector<4x128xbf16>
    %cst_9 = arith.constant dense<0.000000e+00> : vector<256x128xf32>
    %16 = tpu.matmul %13, %15, %cst_9 {dimension_numbers = #tpu.dot_dimension_numbers<[1], [0], [0], [1], [0, 0, 1, 1], [], []>} : vector<256x4xbf16>, vector<4x128xbf16>, vector<256x128xf32> -> vector<256x128xf32>
    %17 = arith.addf %10, %16 : vector<256x128xf32>
    %18 = vector.extract_strided_slice %2 {offsets = [0, 2, 0], sizes = [16, 16, 4], strides = [1, 1, 1]} : vector<18x18x4xf32> to vector<16x16x4xf32>
    %19 = vector.shape_cast %18 : vector<16x16x4xf32> to vector<256x4xf32>
    %20 = arith.truncf %19 : vector<256x4xf32> to vector<256x4xbf16>
    %c2 = arith.constant 2 : index
    %c0_10 = arith.constant 0 : index
    %c0_11 = arith.constant 0 : index
    %21 = vector.load %arg2[%c2, %c0_10, %c0_11] : memref<9x4x128xbf16, #tpu.memory_space<vmem>>, vector<1x4x128xbf16>
    %22 = vector.shape_cast %21 : vector<1x4x128xbf16> to vector<4x128xbf16>
    %cst_12 = arith.constant dense<0.000000e+00> : vector<256x128xf32>
    %23 = tpu.matmul %20, %22, %cst_12 {dimension_numbers = #tpu.dot_dimension_numbers<[1], [0], [0], [1], [0, 0, 1, 1], [], []>} : vector<256x4xbf16>, vector<4x128xbf16>, vector<256x128xf32> -> vector<256x128xf32>
    %24 = arith.addf %17, %23 : vector<256x128xf32>
    %25 = vector.extract_strided_slice %2 {offsets = [1, 0, 0], sizes = [16, 16, 4], strides = [1, 1, 1]} : vector<18x18x4xf32> to vector<16x16x4xf32>
    %26 = vector.shape_cast %25 : vector<16x16x4xf32> to vector<256x4xf32>
    %27 = arith.truncf %26 : vector<256x4xf32> to vector<256x4xbf16>
    %c3 = arith.constant 3 : index
    %c0_13 = arith.constant 0 : index
    %c0_14 = arith.constant 0 : index
    %28 = vector.load %arg2[%c3, %c0_13, %c0_14] : memref<9x4x128xbf16, #tpu.memory_space<vmem>>, vector<1x4x128xbf16>
    %29 = vector.shape_cast %28 : vector<1x4x128xbf16> to vector<4x128xbf16>
    %cst_15 = arith.constant dense<0.000000e+00> : vector<256x128xf32>
    %30 = tpu.matmul %27, %29, %cst_15 {dimension_numbers = #tpu.dot_dimension_numbers<[1], [0], [0], [1], [0, 0, 1, 1], [], []>} : vector<256x4xbf16>, vector<4x128xbf16>, vector<256x128xf32> -> vector<256x128xf32>
    %31 = arith.addf %24, %30 : vector<256x128xf32>
    %32 = vector.extract_strided_slice %2 {offsets = [1, 1, 0], sizes = [16, 16, 4], strides = [1, 1, 1]} : vector<18x18x4xf32> to vector<16x16x4xf32>
    %33 = vector.shape_cast %32 : vector<16x16x4xf32> to vector<256x4xf32>
    %34 = arith.truncf %33 : vector<256x4xf32> to vector<256x4xbf16>
    %c4 = arith.constant 4 : index
    %c0_16 = arith.constant 0 : index
    %c0_17 = arith.constant 0 : index
    %35 = vector.load %arg2[%c4, %c0_16, %c0_17] : memref<9x4x128xbf16, #tpu.memory_space<vmem>>, vector<1x4x128xbf16>
    %36 = vector.shape_cast %35 : vector<1x4x128xbf16> to vector<4x128xbf16>
    %cst_18 = arith.constant dense<0.000000e+00> : vector<256x128xf32>
    %37 = tpu.matmul %34, %36, %cst_18 {dimension_numbers = #tpu.dot_dimension_numbers<[1], [0], [0], [1], [0, 0, 1, 1], [], []>} : vector<256x4xbf16>, vector<4x128xbf16>, vector<256x128xf32> -> vector<256x128xf32>
    %38 = arith.addf %31, %37 : vector<256x128xf32>
    %39 = vector.extract_strided_slice %2 {offsets = [1, 2, 0], sizes = [16, 16, 4], strides = [1, 1, 1]} : vector<18x18x4xf32> to vector<16x16x4xf32>
    %40 = vector.shape_cast %39 : vector<16x16x4xf32> to vector<256x4xf32>
    %41 = arith.truncf %40 : vector<256x4xf32> to vector<256x4xbf16>
    %c5 = arith.constant 5 : index
    %c0_19 = arith.constant 0 : index
    %c0_20 = arith.constant 0 : index
    %42 = vector.load %arg2[%c5, %c0_19, %c0_20] : memref<9x4x128xbf16, #tpu.memory_space<vmem>>, vector<1x4x128xbf16>
    %43 = vector.shape_cast %42 : vector<1x4x128xbf16> to vector<4x128xbf16>
    %cst_21 = arith.constant dense<0.000000e+00> : vector<256x128xf32>
    %44 = tpu.matmul %41, %43, %cst_21 {dimension_numbers = #tpu.dot_dimension_numbers<[1], [0], [0], [1], [0, 0, 1, 1], [], []>} : vector<256x4xbf16>, vector<4x128xbf16>, vector<256x128xf32> -> vector<256x128xf32>
    %45 = arith.addf %38, %44 : vector<256x128xf32>
    %46 = vector.extract_strided_slice %2 {offsets = [2, 0, 0], sizes = [16, 16, 4], strides = [1, 1, 1]} : vector<18x18x4xf32> to vector<16x16x4xf32>
    %47 = vector.shape_cast %46 : vector<16x16x4xf32> to vector<256x4xf32>
    %48 = arith.truncf %47 : vector<256x4xf32> to vector<256x4xbf16>
    %c6 = arith.constant 6 : index
    %c0_22 = arith.constant 0 : index
    %c0_23 = arith.constant 0 : index
    %49 = vector.load %arg2[%c6, %c0_22, %c0_23] : memref<9x4x128xbf16, #tpu.memory_space<vmem>>, vector<1x4x128xbf16>
    %50 = vector.shape_cast %49 : vector<1x4x128xbf16> to vector<4x128xbf16>
    %cst_24 = arith.constant dense<0.000000e+00> : vector<256x128xf32>
    %51 = tpu.matmul %48, %50, %cst_24 {dimension_numbers = #tpu.dot_dimension_numbers<[1], [0], [0], [1], [0, 0, 1, 1], [], []>} : vector<256x4xbf16>, vector<4x128xbf16>, vector<256x128xf32> -> vector<256x128xf32>
    %52 = arith.addf %45, %51 : vector<256x128xf32>
    %53 = vector.extract_strided_slice %2 {offsets = [2, 1, 0], sizes = [16, 16, 4], strides = [1, 1, 1]} : vector<18x18x4xf32> to vector<16x16x4xf32>
    %54 = vector.shape_cast %53 : vector<16x16x4xf32> to vector<256x4xf32>
    %55 = arith.truncf %54 : vector<256x4xf32> to vector<256x4xbf16>
    %c7 = arith.constant 7 : index
    %c0_25 = arith.constant 0 : index
    %c0_26 = arith.constant 0 : index
    %56 = vector.load %arg2[%c7, %c0_25, %c0_26] : memref<9x4x128xbf16, #tpu.memory_space<vmem>>, vector<1x4x128xbf16>
    %57 = vector.shape_cast %56 : vector<1x4x128xbf16> to vector<4x128xbf16>
    %cst_27 = arith.constant dense<0.000000e+00> : vector<256x128xf32>
    %58 = tpu.matmul %55, %57, %cst_27 {dimension_numbers = #tpu.dot_dimension_numbers<[1], [0], [0], [1], [0, 0, 1, 1], [], []>} : vector<256x4xbf16>, vector<4x128xbf16>, vector<256x128xf32> -> vector<256x128xf32>
    %59 = arith.addf %52, %58 : vector<256x128xf32>
    %60 = vector.extract_strided_slice %2 {offsets = [2, 2, 0], sizes = [16, 16, 4], strides = [1, 1, 1]} : vector<18x18x4xf32> to vector<16x16x4xf32>
    %61 = vector.shape_cast %60 : vector<16x16x4xf32> to vector<256x4xf32>
    %62 = arith.truncf %61 : vector<256x4xf32> to vector<256x4xbf16>
    %c8 = arith.constant 8 : index
    %c0_28 = arith.constant 0 : index
    %c0_29 = arith.constant 0 : index
    %63 = vector.load %arg2[%c8, %c0_28, %c0_29] : memref<9x4x128xbf16, #tpu.memory_space<vmem>>, vector<1x4x128xbf16>
    %64 = vector.shape_cast %63 : vector<1x4x128xbf16> to vector<4x128xbf16>
    %cst_30 = arith.constant dense<0.000000e+00> : vector<256x128xf32>
    %65 = tpu.matmul %62, %64, %cst_30 {dimension_numbers = #tpu.dot_dimension_numbers<[1], [0], [0], [1], [0, 0, 1, 1], [], []>} : vector<256x4xbf16>, vector<4x128xbf16>, vector<256x128xf32> -> vector<256x128xf32>
    %66 = arith.addf %59, %65 : vector<256x128xf32>
    %cst_31 = arith.constant 0.000000e+00 : f32
    %67 = vector.broadcast %cst_31 : f32 to vector<256x128xf32>
    %68 = arith.maximumf %66, %67 : vector<256x128xf32>
    %cst_32 = arith.constant dense<0.000000e+00> : vector<128xf32>
    %69 = vector.multi_reduction <add>, %68, %cst_32 [0] : vector<256x128xf32> to vector<128xf32>
    %70 = vector.shape_cast %69 : vector<128xf32> to vector<1x128xf32>
    %cst_33 = arith.constant 3.906250e-03 : f32
    %71 = vector.broadcast %cst_33 : f32 to vector<1x128xf32>
    %72 = arith.mulf %70, %71 : vector<1x128xf32>
    %c0_34 = arith.constant 0 : index
    %c0_35 = arith.constant 0 : index
    %73 = vector.load %arg3[%c0_34, %c0_35] : memref<128x256xf32, #tpu.memory_space<vmem>>, vector<128x256xf32>
    %cst_36 = arith.constant dense<0.000000e+00> : vector<1x256xf32>
    %74 = tpu.matmul %72, %73, %cst_36 {dimension_numbers = #tpu.dot_dimension_numbers<[1], [0], [0], [1], [0, 0, 1, 1], [], []>} : vector<1x128xf32>, vector<128x256xf32>, vector<1x256xf32> -> vector<1x256xf32>
    %c0_37 = arith.constant 0 : index
    %c0_38 = arith.constant 0 : index
    %75 = vector.load %arg4[%c0_37, %c0_38] : memref<1x256xf32, #tpu.memory_space<vmem>>, vector<1x256xf32>
    %76 = arith.addf %74, %75 : vector<1x256xf32>
    %cst_39 = arith.constant 0.000000e+00 : f32
    %77 = vector.broadcast %cst_39 : f32 to vector<1x256xf32>
    %78 = arith.maximumf %76, %77 : vector<1x256xf32>
    %c0_40 = arith.constant 0 : index
    %c0_41 = arith.constant 0 : index
    %79 = vector.load %arg5[%c0_40, %c0_41] : memref<256x2xf32, #tpu.memory_space<vmem>>, vector<256x2xf32>
    %cst_42 = arith.constant dense<0.000000e+00> : vector<1x2xf32>
    %80 = tpu.matmul %78, %79, %cst_42 {dimension_numbers = #tpu.dot_dimension_numbers<[1], [0], [0], [1], [0, 0, 1, 1], [], []>} : vector<1x256xf32>, vector<256x2xf32>, vector<1x2xf32> -> vector<1x2xf32>
    %c0_43 = arith.constant 0 : index
    %c0_44 = arith.constant 0 : index
    %81 = vector.load %arg6[%c0_43, %c0_44] : memref<1x2xf32, #tpu.memory_space<vmem>>, vector<1x2xf32>
    %82 = arith.addf %80, %81 : vector<1x2xf32>
    %cst_45 = arith.constant dense<0xFF800000> : vector<1xf32>
    %83 = vector.multi_reduction <maximumf>, %82, %cst_45 [1] : vector<1x2xf32> to vector<1xf32>
    %84 = vector.shape_cast %83 : vector<1xf32> to vector<1x1xf32>
    %85 = vector.broadcast %84 : vector<1x1xf32> to vector<1x2xf32>
    %86 = arith.subf %82, %85 : vector<1x2xf32>
    %87 = math.exp %86 : vector<1x2xf32>
    %cst_46 = arith.constant dense<0.000000e+00> : vector<1xf32>
    %88 = vector.multi_reduction <add>, %87, %cst_46 [1] : vector<1x2xf32> to vector<1xf32>
    %89 = vector.shape_cast %88 : vector<1xf32> to vector<1x1xf32>
    %90 = math.log %89 : vector<1x1xf32>
    %91 = vector.broadcast %90 : vector<1x1xf32> to vector<1x2xf32>
    %92 = arith.subf %86, %91 : vector<1x2xf32>
    %c0_47 = arith.constant 0 : index
    %c0_48 = arith.constant 0 : index
    %c0_49 = arith.constant 0 : index
    %93 = vector.load %arg7[%c0_47, %c0_48, %c0_49] : memref<1x1x2xf32, #tpu.memory_space<vmem>>, vector<1x1x2xf32>
    %94 = vector.shape_cast %93 : vector<1x1x2xf32> to vector<1x2xf32>
    %95 = vector.shape_cast %92 : vector<1x2xf32> to vector<1x1x2xf32>
    tpu.vector_store %arg7[%c0_47, %c0_48, %c0_49], %95 {strides = array<i32>} : memref<1x1x2xf32, #tpu.memory_space<vmem>>, vector<1x1x2xf32>,
    return
  }
  func.func @transform_0(%arg0: i32) -> (i32, i32, i32, i32) {
    %c0_i32 = arith.constant 0 : i32
    %c0_i32_0 = arith.constant 0 : i32
    %c0_i32_1 = arith.constant 0 : i32
    %c0_i32_2 = arith.constant 0 : i32
    return %arg0, %c0_i32, %c0_i32_0, %c0_i32_1 : i32, i32, i32, i32
  }
  func.func @transform_1(%arg0: i32) -> (i32, i32, i32) {
    %c0_i32 = arith.constant 0 : i32
    %c0_i32_0 = arith.constant 0 : i32
    %c0_i32_1 = arith.constant 0 : i32
    %c0_i32_2 = arith.constant 0 : i32
    return %c0_i32, %c0_i32_0, %c0_i32_1 : i32, i32, i32
  }
  func.func @transform_2(%arg0: i32) -> (i32, i32) {
    %c0_i32 = arith.constant 0 : i32
    %c0_i32_0 = arith.constant 0 : i32
    %c0_i32_1 = arith.constant 0 : i32
    return %c0_i32, %c0_i32_0 : i32, i32
  }
  func.func @transform_3(%arg0: i32) -> (i32, i32) {
    %c0_i32 = arith.constant 0 : i32
    %c0_i32_0 = arith.constant 0 : i32
    %c0_i32_1 = arith.constant 0 : i32
    return %c0_i32, %c0_i32_0 : i32, i32
  }
  func.func @transform_4(%arg0: i32) -> (i32, i32) {
    %c0_i32 = arith.constant 0 : i32
    %c0_i32_0 = arith.constant 0 : i32
    %c0_i32_1 = arith.constant 0 : i32
    return %c0_i32, %c0_i32_0 : i32, i32
  }
  func.func @transform_5(%arg0: i32) -> (i32, i32) {
    %c0_i32 = arith.constant 0 : i32
    %c0_i32_0 = arith.constant 0 : i32
    %c0_i32_1 = arith.constant 0 : i32
    return %c0_i32, %c0_i32_0 : i32, i32
  }
  func.func @transform_6(%arg0: i32) -> (i32, i32, i32) {
    %c0_i32 = arith.constant 0 : i32
    %c0_i32_0 = arith.constant 0 : i32
    %c0_i32_1 = arith.constant 0 : i32
    return %arg0, %c0_i32, %c0_i32_0 : i32, i32, i32
  }
}

</mosaic_0001>

<llo_original>
// kernel: resnet_pre_net_forward.1
$region0: #{resnet_pre_net_forward.1}
  #allocation0 [shape = 'u32[]', space=smem, size = 0x4, offset = 0x4, fixed_abs, tag = 'smem constant byte address 0x4 - core index']
  #allocation1 [shape = 'u32[72,128]{1,0:T(1,128)}', space=vmem, size = 0x9000, scoped, tag = 'internal scratch']
  %s0 = inlined_call_operand.vmem [shape: bf16[2,18,18,4], index: 0, kind: input, shape index: {}]
  %s1 = inlined_call_operand.vmem [shape: bf16[9,4,128], index: 1, kind: input, shape index: {}]
  %s2 = inlined_call_operand.vmem [shape: f32[128,256], index: 2, kind: input, shape index: {}]
  %s3 = inlined_call_operand.vmem [shape: f32[1,256], index: 3, kind: input, shape index: {}]
  %s4 = inlined_call_operand.vmem [shape: f32[256,2], index: 4, kind: input, shape index: {}]
  %s5 = inlined_call_operand.vmem [shape: f32[1,2], index: 5, kind: input, shape index: {}]
  %s6 = inlined_call_operand.hbm [shape: f32[2,1,2], index: 6, kind: output, shape index: {}]
  %s7 = sld [smem:[#allocation0]]
  $region57: #{resnet_pre_net_forward.1} parent=0
    _
  %s9 = ssub.s32 1, %s7
  %s10 = scalar_select 0, %s9, %s7
  $region1: #{resnet_pre_net_forward.1} parent=0
    #allocation2 [shape = 'u8[1024]{0}', space=vmem, size = 0x400, scoped, tag = 'output window, operand 0']
    #allocation3 [shape = 's32[2]{0}', space=sflag, size = 0x8, scoped, tag = 'scoped memory for resnet_pre_net_forward.1']
    %11 = vsyncpa [#allocation3], 0
    %s12 = scalar_lea.sflag [#allocation3], 1
    %13 = vsyncpa %s12, 0
    loop: start=0, step=1, limit=4
    $region2: #{resnet_pre_net_forward.1} parent=1 // loop_pre_header
      _
    $region3: #{resnet_pre_net_forward.1} parent=1 // loop_header
      %s15 = sphi 0, %s19
      %p16 = scmp.ge.s32.totalorder %s15, 4
      %s25 = sphi 0, %s27
      %s28 = sphi 0, %s25
      %s29 = sphi 0, %s28
      %s45 = sphi 0, %s29
      %s49 = sphi 0, %s49
      %s51 = sphi 0, %s49
      %s52 = sphi 0, %s51
      %s66 = sphi 0, %s52
      %s70 = sphi 0, %s70
      %s72 = sphi 0, %s70
      %s73 = sphi 0, %s72
      %s87 = sphi 0, %s73
      %s91 = sphi 0, %s91
      %s93 = sphi 0, %s91
      %s94 = sphi 0, %s93
      %s108 = sphi 0, %s94
      %s112 = sphi 0, %s112
      %s114 = sphi 0, %s112
      %s115 = sphi 0, %s114
      %s129 = sphi 0, %s115
      %s133 = sphi 0, %s133
      %s135 = sphi 0, %s133
      %s136 = sphi 0, %s135
      %s150 = sphi 0, %s136
      %s156 = sphi 0, %s158
      %s159 = sphi 0, %s156
      %s160 = sphi 0, %s159
      %s176 = sphi 0, %s160
    $region4: #{resnet_pre_net_forward.1} parent=1 // loop_header_branch
      %18 = sbr.rel (%p16) target = $region8
    $region5: #{resnet_pre_net_forward.1} parent=1 // loop_body
      %s20 = ssub.s32 %s15, 1
      %s21 = ssub.s32 %s15, 2
      %s22 = sadd.s32 %s15, 1
      %s23 = ssub.s32 %s15, %s22
      %p24 = scmp.eq.s32.totalorder %s23, 0
      %s26 = sadd.s32 %s25, 1
      %s27 = scalar_select %p24, %s25, %s26
      %p30 = pneg %p24
      %p31 = scmp.eq.s32.totalorder %s15, 1
      %p32 = por %p30, %p31
      %p33 = scmp.ne.s32.totalorder %s25, %s28
      %p34 = scmp.eq.s32.totalorder %s15, 0
      %p35 = por %p33, %p34
      %p36 = scmp.ne.s32.totalorder %s25, %s28
      %p37 = scmp.eq.s32.totalorder %s20, 1
      %p38 = por %p36, %p37
      %p39 = scmp.ne.s32.totalorder %s28, %s29
      %p40 = scmp.eq.s32.totalorder %s20, 0
      %p41 = por %p39, %p40
      %p42 = scmp.ne.s32.totalorder %s28, %s29
      %p43 = scmp.eq.s32.totalorder %s21, 1
      %p44 = por %p42, %p43
      %p46 = scmp.ne.s32.totalorder %s29, %s45
      %p47 = scmp.eq.s32.totalorder %s21, 0
      %p48 = por %p46, %p47
      %s50 = sadd.s32 %s49, 1
      %p53 = scmp.eq.s32.totalorder %s15, 1
      %p54 = scmp.ne.s32.totalorder %s49, %s51
      %p55 = scmp.eq.s32.totalorder %s15, 0
      %p56 = por %p54, %p55
      %p57 = scmp.ne.s32.totalorder %s49, %s51
      %p58 = scmp.eq.s32.totalorder %s20, 1
      %p59 = por %p57, %p58
      %p60 = scmp.ne.s32.totalorder %s51, %s52
      %p61 = scmp.eq.s32.totalorder %s20, 0
      %p62 = por %p60, %p61
      %p63 = scmp.ne.s32.totalorder %s51, %s52
      %p64 = scmp.eq.s32.totalorder %s21, 1
      %p65 = por %p63, %p64
      %p67 = scmp.ne.s32.totalorder %s52, %s66
      %p68 = scmp.eq.s32.totalorder %s21, 0
      %p69 = por %p67, %p68
      %s71 = sadd.s32 %s70, 1
      %p74 = scmp.eq.s32.totalorder %s15, 1
      %p75 = scmp.ne.s32.totalorder %s70, %s72
      %p76 = scmp.eq.s32.totalorder %s15, 0
      %p77 = por %p75, %p76
      %p78 = scmp.ne.s32.totalorder %s70, %s72
      %p79 = scmp.eq.s32.totalorder %s20, 1
      %p80 = por %p78, %p79
      %p81 = scmp.ne.s32.totalorder %s72, %s73
      %p82 = scmp.eq.s32.totalorder %s20, 0
      %p83 = por %p81, %p82
      %p84 = scmp.ne.s32.totalorder %s72, %s73
      %p85 = scmp.eq.s32.totalorder %s21, 1
      %p86 = por %p84, %p85
      %p88 = scmp.ne.s32.totalorder %s73, %s87
      %p89 = scmp.eq.s32.totalorder %s21, 0
      %p90 = por %p88, %p89
      %s92 = sadd.s32 %s91, 1
      %p95 = scmp.eq.s32.totalorder %s15, 1
      %p96 = scmp.ne.s32.totalorder %s91, %s93
      %p97 = scmp.eq.s32.totalorder %s15, 0
      %p98 = por %p96, %p97
      %p99 = scmp.ne.s32.totalorder %s91, %s93
      %p100 = scmp.eq.s32.totalorder %s20, 1
      %p101 = por %p99, %p100
      %p102 = scmp.ne.s32.totalorder %s93, %s94
      %p103 = scmp.eq.s32.totalorder %s20, 0
      %p104 = por %p102, %p103
      %p105 = scmp.ne.s32.totalorder %s93, %s94
      %p106 = scmp.eq.s32.totalorder %s21, 1
      %p107 = por %p105, %p106
      %p109 = scmp.ne.s32.totalorder %s94, %s108
      %p110 = scmp.eq.s32.totalorder %s21, 0
      %p111 = por %p109, %p110
      %s113 = sadd.s32 %s112, 1
      %p116 = scmp.eq.s32.totalorder %s15, 1
      %p117 = scmp.ne.s32.totalorder %s112, %s114
      %p118 = scmp.eq.s32.totalorder %s15, 0
      %p119 = por %p117, %p118
      %p120 = scmp.ne.s32.totalorder %s112, %s114
      %p121 = scmp.eq.s32.totalorder %s20, 1
      %p122 = por %p120, %p121
      %p123 = scmp.ne.s32.totalorder %s114, %s115
      %p124 = scmp.eq.s32.totalorder %s20, 0
      %p125 = por %p123, %p124
      %p126 = scmp.ne.s32.totalorder %s114, %s115
      %p127 = scmp.eq.s32.totalorder %s21, 1
      %p128 = por %p126, %p127
      %p130 = scmp.ne.s32.totalorder %s115, %s129
      %p131 = scmp.eq.s32.totalorder %s21, 0
      %p132 = por %p130, %p131
      %s134 = sadd.s32 %s133, 1
      %p137 = scmp.eq.s32.totalorder %s15, 1
      %p138 = scmp.ne.s32.totalorder %s133, %s135
      %p139 = scmp.eq.s32.totalorder %s15, 0
      %p140 = por %p138, %p139
      %p141 = scmp.ne.s32.totalorder %s133, %s135
      %p142 = scmp.eq.s32.totalorder %s20, 1
      %p143 = por %p141, %p142
      %p144 = scmp.ne.s32.totalorder %s135, %s136
      %p145 = scmp.eq.s32.totalorder %s20, 0
      %p146 = por %p144, %p145
      %p147 = scmp.ne.s32.totalorder %s135, %s136
      %p148 = scmp.eq.s32.totalorder %s21, 1
      %p149 = por %p147, %p148
      %p151 = scmp.ne.s32.totalorder %s136, %s150
      %p152 = scmp.eq.s32.totalorder %s21, 0
      %p153 = por %p151, %p152
      %s154 = ssub.s32 %s15, %s22
      %p155 = scmp.eq.s32.totalorder %s154, 0
      %s157 = sadd.s32 %s156, 1
      %s158 = scalar_select %p155, %s156, %s157
      %p161 = pneg %p155
      %p162 = scmp.eq.s32.totalorder %s15, 1
      %p163 = por %p161, %p162
      %p164 = scmp.ne.s32.totalorder %s156, %s159
      %p165 = scmp.eq.s32.totalorder %s15, 0
      %p166 = por %p164, %p165
      %p167 = scmp.ne.s32.totalorder %s156, %s159
      %p168 = scmp.eq.s32.totalorder %s20, 1
      %p169 = por %p167, %p168
      %p170 = scmp.ne.s32.totalorder %s159, %s160
      %p171 = scmp.eq.s32.totalorder %s20, 0
      %p172 = por %p170, %p171
      %p173 = scmp.ne.s32.totalorder %s159, %s160
      %p174 = scmp.eq.s32.totalorder %s21, 1
      %p175 = por %p173, %p174
      %p177 = scmp.ne.s32.totalorder %s160, %s176
      %p178 = scmp.eq.s32.totalorder %s21, 0
      %p179 = por %p177, %p178
      %p180 = scmp.le.s32.totalorder 1, %s15
      %p181 = scmp.lt.s32.totalorder %s15, 3
      %p182 = pnand %p180, %p181
      %p183 = pneg %p182
      // Predicated region
      $region9: #{resnet_pre_net_forward.1} parent=5 // pred_check
        _
      $region10: #{resnet_pre_net_forward.1} parent=5 // pred_check_branch
        %185 = sbr.rel (%p182) target = $region12
      $region11: #{resnet_pre_net_forward.1} parent=5 // pred_region
        %s186 = ssub.s32 %s15, 1
        // Predicated region
        $region13: #{resnet_pre_net_forward.1} parent=11 // pred_check
          %p187 = pneg %p62
        $region14: #{resnet_pre_net_forward.1} parent=11 // pred_check_branch
          %189 = sbr.rel (%p187) target = $region16
        $region15: #{resnet_pre_net_forward.1} parent=11 // pred_region
          _
        $region16: #{resnet_pre_net_forward.1} parent=11 // pred_fallthru
          _
        // Predicated region
        $region17: #{resnet_pre_net_forward.1} parent=11 // pred_check
          %p190 = pneg %p83
        $region18: #{resnet_pre_net_forward.1} parent=11 // pred_check_branch
          %192 = sbr.rel (%p190) target = $region20
        $region19: #{resnet_pre_net_forward.1} parent=11 // pred_region
          _
        $region20: #{resnet_pre_net_forward.1} parent=11 // pred_fallthru
          _
        // Predicated region
        $region21: #{resnet_pre_net_forward.1} parent=11 // pred_check
          %p193 = pneg %p104
        $region22: #{resnet_pre_net_forward.1} parent=11 // pred_check_branch
          %195 = sbr.rel (%p193) target = $region24
        $region23: #{resnet_pre_net_forward.1} parent=11 // pred_region
          _
        $region24: #{resnet_pre_net_forward.1} parent=11 // pred_fallthru
          _
        // Predicated region
        $region25: #{resnet_pre_net_forward.1} parent=11 // pred_check
          %p196 = pneg %p125
        $region26: #{resnet_pre_net_forward.1} parent=11 // pred_check_branch
          %198 = sbr.rel (%p196) target = $region28
        $region27: #{resnet_pre_net_forward.1} parent=11 // pred_region
          _
        $region28: #{resnet_pre_net_forward.1} parent=11 // pred_fallthru
          _
        // Predicated region
        $region29: #{resnet_pre_net_forward.1} parent=11 // pred_check
          %p199 = pneg %p146
        $region30: #{resnet_pre_net_forward.1} parent=11 // pred_check_branch
          %201 = sbr.rel (%p199) target = $region32
        $region31: #{resnet_pre_net_forward.1} parent=11 // pred_region
          _
        $region32: #{resnet_pre_net_forward.1} parent=11 // pred_fallthru
          _
      $region12: #{resnet_pre_net_forward.1} parent=5 // pred_fallthru
        _
      %p202 = scmp.lt.s32.totalorder %s15, 2
      // Predicated region
      $region33: #{resnet_pre_net_forward.1} parent=5 // pred_check
        %p203 = pneg %p202
      $region34: #{resnet_pre_net_forward.1} parent=5 // pred_check_branch
        %205 = sbr.rel (%p203) target = $region36
      $region35: #{resnet_pre_net_forward.1} parent=5 // pred_region
        // Predicated region
        $region37: #{resnet_pre_net_forward.1} parent=35 // pred_check
          %p206 = pneg %p35
        $region38: #{resnet_pre_net_forward.1} parent=35 // pred_check_branch
          %208 = sbr.rel (%p206) target = $region40
        $region39: #{resnet_pre_net_forward.1} parent=35 // pred_region
          %p209 = scmp.lt.s32.totalorder %s15, 1
          %s210 = scalar_select %p209, %s15, 1
          %s211 = smul.addr %s210, 54
          %s212 = smul.addr %s211, 4
          %s213 = scalar_lea.vmem %s0, %s212
        $region40: #{resnet_pre_net_forward.1} parent=35 // pred_fallthru
          _
      $region36: #{resnet_pre_net_forward.1} parent=5 // pred_fallthru
        _
      %p214 = scmp.le.s32.totalorder 1, %s15
      %p215 = scmp.lt.s32.totalorder %s15, 3
      %p216 = pnand %p214, %p215
      %p217 = pneg %p216
      // Predicated region
      $region41: #{resnet_pre_net_forward.1} parent=5 // pred_check
        _
      $region42: #{resnet_pre_net_forward.1} parent=5 // pred_check_branch
        %219 = sbr.rel (%p216) target = $region44
      $region43: #{resnet_pre_net_forward.1} parent=5 // pred_region
        %s220 = ssub.s32 %s15, 1
        %p221 = scmp.lt.s32.totalorder %s20, 1
        %s222 = scalar_select %p221, %s20, 1
        %s223 = smul.addr %s222, 54
        %s224 = smul.addr %s223, 4
        %s225 = scalar_lea.vmem %s0, %s224
        %p226 = pneg %p41
        %p227 = pneg %p38
        %p228 = pneg %p62
        %p229 = pneg %p59
        %p230 = pneg %p83
        %p231 = pneg %p80
        %p232 = pneg %p104
        %p233 = pneg %p101
        %p234 = pneg %p125
        %p235 = pneg %p122
        %p236 = pneg %p146
        %p237 = pneg %p143
        %p238 = pneg %p172
        %p239 = pneg %p169
        %s240 = sand.u32 %s159, 1
        %s241 = scalar_lea.sflag [#allocation3], %s240
        %s242 = sand.u32 %s159, 1
        %s243 = scalar_lea.vmem [#allocation2], %s242
        %p244 = scmp.lt.s32.totalorder %s20, 1
        %s245 = scalar_select %p244, %s20, 1
        %s246 = smul.addr %s245, 54
        %s247 = smul.addr %s246, 4
        %s248 = scalar_lea.vmem %s0, %s247
        %v250 = vld [vmem:[%s248] sm:$0xf]
        %v251 = vld [vmem:[%s248 + $0x4] sm:$0xf]
        %v252 = vld [vmem:[%s248 + $0x8] sm:$0x1]
        %v253 = vld [vmem:[%s248 + $0xc] sm:$0xf]
        %v254 = vld [vmem:[%s248 + $0x10] sm:$0xf]
        %v255 = vld [vmem:[%s248 + $0x14] sm:$0x1]
        %v256 = vld [vmem:[%s248 + $0x18] sm:$0xf]
        %v257 = vld [vmem:[%s248 + $0x1c] sm:$0xf]
        %v258 = vld [vmem:[%s248 + $0x20] sm:$0x1]
        %v259 = vld [vmem:[%s248 + $0x24] sm:$0xf]
        %v260 = vld [vmem:[%s248 + $0x28] sm:$0xf]
        %v261 = vld [vmem:[%s248 + $0x2c] sm:$0x1]
        %v262 = vld [vmem:[%s248 + $0x30] sm:$0xf]
        %v263 = vld [vmem:[%s248 + $0x34] sm:$0xf]
        %v264 = vld [vmem:[%s248 + $0x38] sm:$0x1]
        %v265 = vld [vmem:[%s248 + $0x3c] sm:$0xf]
        %v266 = vld [vmem:[%s248 + $0x40] sm:$0xf]
        %v267 = vld [vmem:[%s248 + $0x44] sm:$0x1]
        %v268 = vld [vmem:[%s248 + $0x48] sm:$0xf]
        %v269 = vld [vmem:[%s248 + $0x4c] sm:$0xf]
        %v270 = vld [vmem:[%s248 + $0x50] sm:$0x1]
        %v271 = vld [vmem:[%s248 + $0x54] sm:$0xf]
        %v272 = vld [vmem:[%s248 + $0x58] sm:$0xf]
        %v273 = vld [vmem:[%s248 + $0x5c] sm:$0x1]
        %v274 = vld [vmem:[%s248 + $0x60] sm:$0xf]
        %v275 = vld [vmem:[%s248 + $0x64] sm:$0xf]
        %v276 = vld [vmem:[%s248 + $0x68] sm:$0x1]
        %v277 = vld [vmem:[%s248 + $0x6c] sm:$0xf]
        %v278 = vld [vmem:[%s248 + $0x70] sm:$0xf]
        %v279 = vld [vmem:[%s248 + $0x74] sm:$0x1]
        %v280 = vld [vmem:[%s248 + $0x78] sm:$0xf]
        %v281 = vld [vmem:[%s248 + $0x7c] sm:$0xf]
        %v282 = vld [vmem:[%s248 + $0x80] sm:$0x1]
        %v283 = vld [vmem:[%s248 + $0x84] sm:$0xf]
        %v284 = vld [vmem:[%s248 + $0x88] sm:$0xf]
        %v285 = vld [vmem:[%s248 + $0x8c] sm:$0x1]
        %v286 = vld [vmem:[%s248 + $0x90] sm:$0xf]
        %v287 = vld [vmem:[%s248 + $0x94] sm:$0xf]
        %v288 = vld [vmem:[%s248 + $0x98] sm:$0x1]
        %v289 = vld [vmem:[%s248 + $0x9c] sm:$0xf]
        %v290 = vld [vmem:[%s248 + $0xa0] sm:$0xf]
        %v291 = vld [vmem:[%s248 + $0xa4] sm:$0x1]
        %v292 = vld [vmem:[%s248 + $0xa8] sm:$0xf]
        %v293 = vld [vmem:[%s248 + $0xac] sm:$0xf]
        %v294 = vld [vmem:[%s248 + $0xb0] sm:$0x1]
        %v295 = vld [vmem:[%s248 + $0xb4] sm:$0xf]
        %v296 = vld [vmem:[%s248 + $0xb8] sm:$0xf]
        %v297 = vld [vmem:[%s248 + $0xbc] sm:$0x1]
        %v298 = vld [vmem:[%s248 + $0xc0] sm:$0xf]
        %v299 = vld [vmem:[%s248 + $0xc4] sm:$0xf]
        %v300 = vld [vmem:[%s248 + $0xc8] sm:$0x1]
        %v301 = vld [vmem:[%s248 + $0xcc] sm:$0xf]
        %v302 = vld [vmem:[%s248 + $0xd0] sm:$0xf]
        %v303 = vld [vmem:[%s248 + $0xd4] sm:$0x1]
        %v304 = vunpack.c.l.bf16 %v250
        %v305 = vunpack.c.l.bf16 %v251
        %v306 = vunpack.c.l.bf16 %v252
        %v307 = vunpack.c.l.bf16 %v253
        %v308 = vunpack.c.l.bf16 %v254
        %v309 = vunpack.c.l.bf16 %v255
        %v310 = vunpack.c.l.bf16 %v256
        %v311 = vunpack.c.l.bf16 %v257
        %v312 = vunpack.c.l.bf16 %v258
        %v313 = vunpack.c.l.bf16 %v259
        %v314 = vunpack.c.l.bf16 %v260
        %v315 = vunpack.c.l.bf16 %v261
        %v316 = vunpack.c.l.bf16 %v262
        %v317 = vunpack.c.l.bf16 %v263
        %v318 = vunpack.c.l.bf16 %v264
        %v319 = vunpack.c.l.bf16 %v265
        %v320 = vunpack.c.l.bf16 %v266
        %v321 = vunpack.c.l.bf16 %v267
        %v322 = vunpack.c.l.bf16 %v268
        %v323 = vunpack.c.l.bf16 %v269
        %v324 = vunpack.c.l.bf16 %v270
        %v325 = vunpack.c.l.bf16 %v271
        %v326 = vunpack.c.l.bf16 %v272
        %v327 = vunpack.c.l.bf16 %v273
        %v328 = vunpack.c.l.bf16 %v274
        %v329 = vunpack.c.l.bf16 %v275
        %v330 = vunpack.c.l.bf16 %v276
        %v331 = vunpack.c.l.bf16 %v277
        %v332 = vunpack.c.l.bf16 %v278
        %v333 = vunpack.c.l.bf16 %v279
        %v334 = vunpack.c.l.bf16 %v280
        %v335 = vunpack.c.l.bf16 %v281
        %v336 = vunpack.c.l.bf16 %v282
        %v337 = vunpack.c.l.bf16 %v283
        %v338 = vunpack.c.l.bf16 %v284
        %v339 = vunpack.c.l.bf16 %v285
        %v340 = vunpack.c.l.bf16 %v286
        %v341 = vunpack.c.l.bf16 %v287
        %v342 = vunpack.c.l.bf16 %v288
        %v343 = vunpack.c.l.bf16 %v289
        %v344 = vunpack.c.l.bf16 %v290
        %v345 = vunpack.c.l.bf16 %v291
        %v346 = vunpack.c.l.bf16 %v292
        %v347 = vunpack.c.l.bf16 %v293
        %v348 = vunpack.c.l.bf16 %v294
        %v349 = vunpack.c.l.bf16 %v295
        %v350 = vunpack.c.l.bf16 %v296
        %v351 = vunpack.c.l.bf16 %v297
        %v352 = vunpack.c.l.bf16 %v298
        %v353 = vunpack.c.l.bf16 %v299
        %v354 = vunpack.c.l.bf16 %v300
        %v355 = vunpack.c.l.bf16 %v301
        %v356 = vunpack.c.l.bf16 %v302
        %v357 = vunpack.c.l.bf16 %v303
        %v358 = vpack.c.bf16 %v305, %v304
        %v359 = vpack.c.bf16 %v308, %v307
        %v360 = vpack.c.bf16 %v311, %v310
        %v361 = vpack.c.bf16 %v314, %v313
        %v362 = vpack.c.bf16 %v317, %v316
        %v363 = vpack.c.bf16 %v320, %v319
        %v364 = vpack.c.bf16 %v323, %v322
        %v365 = vpack.c.bf16 %v326, %v325
        %v366 = vpack.c.bf16 %v329, %v328
        %v367 = vpack.c.bf16 %v332, %v331
        %v368 = vpack.c.bf16 %v335, %v334
        %v369 = vpack.c.bf16 %v338, %v337
        %v370 = vpack.c.bf16 %v341, %v340
        %v371 = vpack.c.bf16 %v344, %v343
        %v372 = vpack.c.bf16 %v347, %v346
        %v373 = vpack.c.bf16 %v350, %v349
        %v374 = vld [vmem:[%s1] sm:$0x3]
        %vm423 = vcmask 1046528
        %v424 = vrot.slane %v304, 1
        %v425 = vrot.slane %v305, 1
        %v426 = vsel %vm423, %v424, %v425
        %v427 = vrot.slane %v306, 1
        %v428 = vsel %vm423, %v425, %v427
        %v429 = vrot.slane %v307, 1
        %v430 = vrot.slane %v308, 1
        %v431 = vsel %vm423, %v429, %v430
        %v432 = vrot.slane %v309, 1
        %v433 = vsel %vm423, %v430, %v432
        %v434 = vrot.slane %v310, 1
        %v435 = vrot.slane %v311, 1
        %v436 = vsel %vm423, %v434, %v435
        %v437 = vrot.slane %v312, 1
        %v438 = vsel %vm423, %v435, %v437
        %v439 = vrot.slane %v313, 1
        %v440 = vrot.slane %v314, 1
        %v441 = vsel %vm423, %v439, %v440
        %v442 = vrot.slane %v315, 1
        %v443 = vsel %vm423, %v440, %v442
        %v444 = vrot.slane %v316, 1
        %v445 = vrot.slane %v317, 1
        %v446 = vsel %vm423, %v444, %v445
        %v447 = vrot.slane %v318, 1
        %v448 = vsel %vm423, %v445, %v447
        %v449 = vrot.slane %v319, 1
        %v450 = vrot.slane %v320, 1
        %v451 = vsel %vm423, %v449, %v450
        %v452 = vrot.slane %v321, 1
        %v453 = vsel %vm423, %v450, %v452
        %v454 = vrot.slane %v322, 1
        %v455 = vrot.slane %v323, 1
        %v456 = vsel %vm423, %v454, %v455
        %v457 = vrot.slane %v324, 1
        %v458 = vsel %vm423, %v455, %v457
        %v459 = vrot.slane %v325, 1
        %v460 = vrot.slane %v326, 1
        %v461 = vsel %vm423, %v459, %v460
        %v462 = vrot.slane %v327, 1
        %v463 = vsel %vm423, %v460, %v462
        %v464 = vrot.slane %v328, 1
        %v465 = vrot.slane %v329, 1
        %v466 = vsel %vm423, %v464, %v465
        %v467 = vrot.slane %v330, 1
        %v468 = vsel %vm423, %v465, %v467
        %v469 = vrot.slane %v331, 1
        %v470 = vrot.slane %v332, 1
        %v471 = vsel %vm423, %v469, %v470
        %v472 = vrot.slane %v333, 1
        %v473 = vsel %vm423, %v470, %v472
        %v474 = vrot.slane %v334, 1
        %v475 = vrot.slane %v335, 1
        %v476 = vsel %vm423, %v474, %v475
        %v477 = vrot.slane %v336, 1
        %v478 = vsel %vm423, %v475, %v477
        %v479 = vrot.slane %v337, 1
        %v480 = vrot.slane %v338, 1
        %v481 = vsel %vm423, %v479, %v480
        %v482 = vrot.slane %v339, 1
        %v483 = vsel %vm423, %v480, %v482
        %v484 = vrot.slane %v340, 1
        %v485 = vrot.slane %v341, 1
        %v486 = vsel %vm423, %v484, %v485
        %v487 = vrot.slane %v342, 1
        %v488 = vsel %vm423, %v485, %v487
        %v489 = vrot.slane %v343, 1
        %v490 = vrot.slane %v344, 1
        %v491 = vsel %vm423, %v489, %v490
        %v492 = vrot.slane %v345, 1
        %v493 = vsel %vm423, %v490, %v492
        %v494 = vrot.slane %v346, 1
        %v495 = vrot.slane %v347, 1
        %v496 = vsel %vm423, %v494, %v495
        %v497 = vrot.slane %v348, 1
        %v498 = vsel %vm423, %v495, %v497
        %v499 = vrot.slane %v349, 1
        %v500 = vrot.slane %v350, 1
        %v501 = vsel %vm423, %v499, %v500
        %v502 = vrot.slane %v351, 1
        %v503 = vsel %vm423, %v500, %v502
        %v536 = vpack.c.bf16 %v428, %v426
        %v537 = vpack.c.bf16 %v433, %v431
        %v538 = vpack.c.bf16 %v438, %v436
        %v539 = vpack.c.bf16 %v443, %v441
        %v540 = vpack.c.bf16 %v448, %v446
        %v541 = vpack.c.bf16 %v453, %v451
        %v542 = vpack.c.bf16 %v458, %v456
        %v543 = vpack.c.bf16 %v463, %v461
        %v544 = vpack.c.bf16 %v468, %v466
        %v545 = vpack.c.bf16 %v473, %v471
        %v546 = vpack.c.bf16 %v478, %v476
        %v547 = vpack.c.bf16 %v483, %v481
        %v548 = vpack.c.bf16 %v488, %v486
        %v549 = vpack.c.bf16 %v493, %v491
        %v550 = vpack.c.bf16 %v498, %v496
        %v551 = vpack.c.bf16 %v503, %v501
        %s552 = scalar_lea.vmem %s1, 2
        %v553 = vld [vmem:[%s552] sm:$0x3]
        %vm554 = vcmask 31744
        %v556 = vsel %vm554, %v536, 0
        %v559 = vsel %vm554, %v537, 0
        %v562 = vsel %vm554, %v538, 0
        %v565 = vsel %vm554, %v539, 0
        %v568 = vsel %vm554, %v540, 0
        %v571 = vsel %vm554, %v541, 0
        %v574 = vsel %vm554, %v542, 0
        %v577 = vsel %vm554, %v543, 0
        %v580 = vsel %vm554, %v544, 0
        %v583 = vsel %vm554, %v545, 0
        %v586 = vsel %vm554, %v546, 0
        %v589 = vsel %vm554, %v547, 0
        %v592 = vsel %vm554, %v548, 0
        %v595 = vsel %vm554, %v549, 0
        %v598 = vsel %vm554, %v550, 0
        %v601 = vsel %vm554, %v551, 0
        %vm603 = vcmask 1041408
        %v605 = vsel %vm603, %v553, 0
        %607 = vmatpush.bf16.msra.mxu0 0
        %608 = vmatpush.bf16.msra.mxu0 0
        %609 = vmatpush.bf16.msra.mxu0 0
        %610 = vmatpush.bf16.msra.mxu0 0
        %611 = vmatpush.bf16.msra.mxu0 0
        %612 = vmatpush.bf16.msra.mxu0 0
        %613 = vmatpush.bf16.msra.mxu0 0
        %614 = vmatpush.bf16.msra.mxu0 %v605
        %615 = vmatmul.bf16.gmra.mxu0 %v556
        %v616 = vpop.f32.mrf.mxu0
        %v617 = vadd.f32 0.0, %v616
        %v618 = vpop.f32.mrf.mxu0
        %v619 = vadd.f32 0.0, %v618
        %620 = vmatmul.bf16.gmra.mxu0 %v559
        %v621 = vpop.f32.mrf.mxu0
        %v622 = vadd.f32 0.0, %v621
        %v623 = vpop.f32.mrf.mxu0
        %v624 = vadd.f32 0.0, %v623
        %625 = vmatmul.bf16.gmra.mxu0 %v562
        %v626 = vpop.f32.mrf.mxu0
        %v627 = vadd.f32 0.0, %v626
        %v628 = vpop.f32.mrf.mxu0
        %v629 = vadd.f32 0.0, %v628
        %630 = vmatmul.bf16.gmra.mxu0 %v565
        %v631 = vpop.f32.mrf.mxu0
        %v632 = vadd.f32 0.0, %v631
        %v633 = vpop.f32.mrf.mxu0
        %v634 = vadd.f32 0.0, %v633
        %635 = vmatmul.bf16.gmra.mxu0 %v568
        %v636 = vpop.f32.mrf.mxu0
        %v637 = vadd.f32 0.0, %v636
        %v638 = vpop.f32.mrf.mxu0
        %v639 = vadd.f32 0.0, %v638
        %640 = vmatmul.bf16.gmra.mxu0 %v571
        %v641 = vpop.f32.mrf.mxu0
        %v642 = vadd.f32 0.0, %v641
        %v643 = vpop.f32.mrf.mxu0
        %v644 = vadd.f32 0.0, %v643
        %645 = vmatmul.bf16.gmra.mxu0 %v574
        %v646 = vpop.f32.mrf.mxu0
        %v647 = vadd.f32 0.0, %v646
        %v648 = vpop.f32.mrf.mxu0
        %v649 = vadd.f32 0.0, %v648
        %650 = vmatmul.bf16.gmra.mxu0 %v577
        %v651 = vpop.f32.mrf.mxu0
        %v652 = vadd.f32 0.0, %v651
        %v653 = vpop.f32.mrf.mxu0
        %v654 = vadd.f32 0.0, %v653
        %655 = vmatmul.bf16.gmra.mxu0 %v580
        %v656 = vpop.f32.mrf.mxu0
        %v657 = vadd.f32 0.0, %v656
        %v658 = vpop.f32.mrf.mxu0
        %v659 = vadd.f32 0.0, %v658
        %660 = vmatmul.bf16.gmra.mxu0 %v583
        %v661 = vpop.f32.mrf.mxu0
        %v662 = vadd.f32 0.0, %v661
        %v663 = vpop.f32.mrf.mxu0
        %v664 = vadd.f32 0.0, %v663
        %665 = vmatmul.bf16.gmra.mxu0 %v586
        %v666 = vpop.f32.mrf.mxu0
        %v667 = vadd.f32 0.0, %v666
        %v668 = vpop.f32.mrf.mxu0
        %v669 = vadd.f32 0.0, %v668
        %670 = vmatmul.bf16.gmra.mxu0 %v589
        %v671 = vpop.f32.mrf.mxu0
        %v672 = vadd.f32 0.0, %v671
        %v673 = vpop.f32.mrf.mxu0
        %v674 = vadd.f32 0.0, %v673
        %675 = vmatmul.bf16.gmra.mxu0 %v592
        %v676 = vpop.f32.mrf.mxu0
        %v677 = vadd.f32 0.0, %v676
        %v678 = vpop.f32.mrf.mxu0
        %v679 = vadd.f32 0.0, %v678
        %680 = vmatmul.bf16.gmra.mxu0 %v595
        %v681 = vpop.f32.mrf.mxu0
        %v682 = vadd.f32 0.0, %v681
        %v683 = vpop.f32.mrf.mxu0
        %v684 = vadd.f32 0.0, %v683
        %685 = vmatmul.bf16.gmra.mxu0 %v598
        %v686 = vpop.f32.mrf.mxu0
        %v687 = vadd.f32 0.0, %v686
        %v688 = vpop.f32.mrf.mxu0
        %v689 = vadd.f32 0.0, %v688
        %690 = vmatmul.bf16.gmra.mxu0 %v601
        %v691 = vpop.f32.mrf.mxu0
        %v692 = vadd.f32 0.0, %v691
        %v693 = vpop.f32.mrf.mxu0
        %v694 = vadd.f32 0.0, %v693
        %695 = vdwg.mxu0
        %v697 = vsel %vm554, %v358, 0
        %v700 = vsel %vm554, %v359, 0
        %v703 = vsel %vm554, %v360, 0
        %v706 = vsel %vm554, %v361, 0
        %v709 = vsel %vm554, %v362, 0
        %v712 = vsel %vm554, %v363, 0
        %v715 = vsel %vm554, %v364, 0
        %v718 = vsel %vm554, %v365, 0
        %v721 = vsel %vm554, %v366, 0
        %v724 = vsel %vm554, %v367, 0
        %v727 = vsel %vm554, %v368, 0
        %v730 = vsel %vm554, %v369, 0
        %v733 = vsel %vm554, %v370, 0
        %v736 = vsel %vm554, %v371, 0
        %v739 = vsel %vm554, %v372, 0
        %v742 = vsel %vm554, %v373, 0
        %v745 = vsel %vm603, %v374, 0
        %747 = vmatpush.bf16.msra.mxu0 0
        %748 = vmatpush.bf16.msra.mxu0 0
        %749 = vmatpush.bf16.msra.mxu0 0
        %750 = vmatpush.bf16.msra.mxu0 0
        %751 = vmatpush.bf16.msra.mxu0 0
        %752 = vmatpush.bf16.msra.mxu0 0
        %753 = vmatpush.bf16.msra.mxu0 0
        %754 = vmatpush.bf16.msra.mxu0 %v745
        %755 = vmatmul.bf16.gmra.mxu0 %v697
        %v756 = vpop.f32.mrf.mxu0
        %v757 = vadd.f32 %v617, %v756
        %v758 = vpop.f32.mrf.mxu0
        %v759 = vadd.f32 %v619, %v758
        %760 = vmatmul.bf16.gmra.mxu0 %v700
        %v761 = vpop.f32.mrf.mxu0
        %v762 = vadd.f32 %v622, %v761
        %v763 = vpop.f32.mrf.mxu0
        %v764 = vadd.f32 %v624, %v763
        %765 = vmatmul.bf16.gmra.mxu0 %v703
        %v766 = vpop.f32.mrf.mxu0
        %v767 = vadd.f32 %v627, %v766
        %v768 = vpop.f32.mrf.mxu0
        %v769 = vadd.f32 %v629, %v768
        %770 = vmatmul.bf16.gmra.mxu0 %v706
        %v771 = vpop.f32.mrf.mxu0
        %v772 = vadd.f32 %v632, %v771
        %v773 = vpop.f32.mrf.mxu0
        %v774 = vadd.f32 %v634, %v773
        %775 = vmatmul.bf16.gmra.mxu0 %v709
        %v776 = vpop.f32.mrf.mxu0
        %v777 = vadd.f32 %v637, %v776
        %v778 = vpop.f32.mrf.mxu0
        %v779 = vadd.f32 %v639, %v778
        %780 = vmatmul.bf16.gmra.mxu0 %v712
        %v781 = vpop.f32.mrf.mxu0
        %v782 = vadd.f32 %v642, %v781
        %v783 = vpop.f32.mrf.mxu0
        %v784 = vadd.f32 %v644, %v783
        %785 = vmatmul.bf16.gmra.mxu0 %v715
        %v786 = vpop.f32.mrf.mxu0
        %v787 = vadd.f32 %v647, %v786
        %v788 = vpop.f32.mrf.mxu0
        %v789 = vadd.f32 %v649, %v788
        %790 = vmatmul.bf16.gmra.mxu0 %v718
        %v791 = vpop.f32.mrf.mxu0
        %v792 = vadd.f32 %v652, %v791
        %v793 = vpop.f32.mrf.mxu0
        %v794 = vadd.f32 %v654, %v793
        %795 = vmatmul.bf16.gmra.mxu0 %v721
        %v796 = vpop.f32.mrf.mxu0
        %v797 = vadd.f32 %v657, %v796
        %v798 = vpop.f32.mrf.mxu0
        %v799 = vadd.f32 %v659, %v798
        %800 = vmatmul.bf16.gmra.mxu0 %v724
        %v801 = vpop.f32.mrf.mxu0
        %v802 = vadd.f32 %v662, %v801
        %v803 = vpop.f32.mrf.mxu0
        %v804 = vadd.f32 %v664, %v803
        %805 = vmatmul.bf16.gmra.mxu0 %v727
        %v806 = vpop.f32.mrf.mxu0
        %v807 = vadd.f32 %v667, %v806
        %v808 = vpop.f32.mrf.mxu0
        %v809 = vadd.f32 %v669, %v808
        %810 = vmatmul.bf16.gmra.mxu0 %v730
        %v811 = vpop.f32.mrf.mxu0
        %v812 = vadd.f32 %v672, %v811
        %v813 = vpop.f32.mrf.mxu0
        %v814 = vadd.f32 %v674, %v813
        %815 = vmatmul.bf16.gmra.mxu0 %v733
        %v816 = vpop.f32.mrf.mxu0
        %v817 = vadd.f32 %v677, %v816
        %v818 = vpop.f32.mrf.mxu0
        %v819 = vadd.f32 %v679, %v818
        %820 = vmatmul.bf16.gmra.mxu0 %v736
        %v821 = vpop.f32.mrf.mxu0
        %v822 = vadd.f32 %v682, %v821
        %v823 = vpop.f32.mrf.mxu0
        %v824 = vadd.f32 %v684, %v823
        %825 = vmatmul.bf16.gmra.mxu0 %v739
        %v826 = vpop.f32.mrf.mxu0
        %v827 = vadd.f32 %v687, %v826
        %v828 = vpop.f32.mrf.mxu0
        %v829 = vadd.f32 %v689, %v828
        %830 = vmatmul.bf16.gmra.mxu0 %v742
        %v831 = vpop.f32.mrf.mxu0
        %v832 = vadd.f32 %v692, %v831
        %v833 = vpop.f32.mrf.mxu0
        %v834 = vadd.f32 %v694, %v833
        %835 = vdwg.mxu0
        %vm836 = vcmask 1045504
        %v837 = vrot.slane %v304, 2
        %v838 = vrot.slane %v305, 2
        %v839 = vsel %vm836, %v837, %v838
        %v840 = vrot.slane %v306, 2
        %v841 = vsel %vm836, %v838, %v840
        %v842 = vrot.slane %v307, 2
        %v843 = vrot.slane %v308, 2
        %v844 = vsel %vm836, %v842, %v843
        %v845 = vrot.slane %v309, 2
        %v846 = vsel %vm836, %v843, %v845
        %v847 = vrot.slane %v310, 2
        %v848 = vrot.slane %v311, 2
        %v849 = vsel %vm836, %v847, %v848
        %v850 = vrot.slane %v312, 2
        %v851 = vsel %vm836, %v848, %v850
        %v852 = vrot.slane %v313, 2
        %v853 = vrot.slane %v314, 2
        %v854 = vsel %vm836, %v852, %v853
        %v855 = vrot.slane %v315, 2
        %v856 = vsel %vm836, %v853, %v855
        %v857 = vrot.slane %v316, 2
        %v858 = vrot.slane %v317, 2
        %v859 = vsel %vm836, %v857, %v858
        %v860 = vrot.slane %v318, 2
        %v861 = vsel %vm836, %v858, %v860
        %v862 = vrot.slane %v319, 2
        %v863 = vrot.slane %v320, 2
        %v864 = vsel %vm836, %v862, %v863
        %v865 = vrot.slane %v321, 2
        %v866 = vsel %vm836, %v863, %v865
        %v867 = vrot.slane %v322, 2
        %v868 = vrot.slane %v323, 2
        %v869 = vsel %vm836, %v867, %v868
        %v870 = vrot.slane %v324, 2
        %v871 = vsel %vm836, %v868, %v870
        %v872 = vrot.slane %v325, 2
        %v873 = vrot.slane %v326, 2
        %v874 = vsel %vm836, %v872, %v873
        %v875 = vrot.slane %v327, 2
        %v876 = vsel %vm836, %v873, %v875
        %v877 = vrot.slane %v328, 2
        %v878 = vrot.slane %v329, 2
        %v879 = vsel %vm836, %v877, %v878
        %v880 = vrot.slane %v330, 2
        %v881 = vsel %vm836, %v878, %v880
        %v882 = vrot.slane %v331, 2
        %v883 = vrot.slane %v332, 2
        %v884 = vsel %vm836, %v882, %v883
        %v885 = vrot.slane %v333, 2
        %v886 = vsel %vm836, %v883, %v885
        %v887 = vrot.slane %v334, 2
        %v888 = vrot.slane %v335, 2
        %v889 = vsel %vm836, %v887, %v888
        %v890 = vrot.slane %v336, 2
        %v891 = vsel %vm836, %v888, %v890
        %v892 = vrot.slane %v337, 2
        %v893 = vrot.slane %v338, 2
        %v894 = vsel %vm836, %v892, %v893
        %v895 = vrot.slane %v339, 2
        %v896 = vsel %vm836, %v893, %v895
        %v897 = vrot.slane %v340, 2
        %v898 = vrot.slane %v341, 2
        %v899 = vsel %vm836, %v897, %v898
        %v900 = vrot.slane %v342, 2
        %v901 = vsel %vm836, %v898, %v900
        %v902 = vrot.slane %v343, 2
        %v903 = vrot.slane %v344, 2
        %v904 = vsel %vm836, %v902, %v903
        %v905 = vrot.slane %v345, 2
        %v906 = vsel %vm836, %v903, %v905
        %v907 = vrot.slane %v346, 2
        %v908 = vrot.slane %v347, 2
        %v909 = vsel %vm836, %v907, %v908
        %v910 = vrot.slane %v348, 2
        %v911 = vsel %vm836, %v908, %v910
        %v912 = vrot.slane %v349, 2
        %v913 = vrot.slane %v350, 2
        %v914 = vsel %vm836, %v912, %v913
        %v915 = vrot.slane %v351, 2
        %v916 = vsel %vm836, %v913, %v915
        %v949 = vpack.c.bf16 %v841, %v839
        %v950 = vpack.c.bf16 %v846, %v844
        %v951 = vpack.c.bf16 %v851, %v849
        %v952 = vpack.c.bf16 %v856, %v854
        %v953 = vpack.c.bf16 %v861, %v859
        %v954 = vpack.c.bf16 %v866, %v864
        %v955 = vpack.c.bf16 %v871, %v869
        %v956 = vpack.c.bf16 %v876, %v874
        %v957 = vpack.c.bf16 %v881, %v879
        %v958 = vpack.c.bf16 %v886, %v884
        %v959 = vpack.c.bf16 %v891, %v889
        %v960 = vpack.c.bf16 %v896, %v894
        %v961 = vpack.c.bf16 %v901, %v899
        %v962 = vpack.c.bf16 %v906, %v904
        %v963 = vpack.c.bf16 %v911, %v909
        %v964 = vpack.c.bf16 %v916, %v914
        %s965 = scalar_lea.vmem %s1, 4
        %v966 = vld [vmem:[%s965] sm:$0x3]
        %v968 = vsel %vm554, %v949, 0
        %v971 = vsel %vm554, %v950, 0
        %v974 = vsel %vm554, %v951, 0
        %v977 = vsel %vm554, %v952, 0
        %v980 = vsel %vm554, %v953, 0
        %v983 = vsel %vm554, %v954, 0
        %v986 = vsel %vm554, %v955, 0
        %v989 = vsel %vm554, %v956, 0
        %v992 = vsel %vm554, %v957, 0
        %v995 = vsel %vm554, %v958, 0
        %v998 = vsel %vm554, %v959, 0
        %v1001 = vsel %vm554, %v960, 0
        %v1004 = vsel %vm554, %v961, 0
        %v1007 = vsel %vm554, %v962, 0
        %v1010 = vsel %vm554, %v963, 0
        %v1013 = vsel %vm554, %v964, 0
        %v1016 = vsel %vm603, %v966, 0
        %1018 = vmatpush.bf16.msra.mxu0 0
        %1019 = vmatpush.bf16.msra.mxu0 0
        %1020 = vmatpush.bf16.msra.mxu0 0
        %1021 = vmatpush.bf16.msra.mxu0 0
        %1022 = vmatpush.bf16.msra.mxu0 0
        %1023 = vmatpush.bf16.msra.mxu0 0
        %1024 = vmatpush.bf16.msra.mxu0 0
        %1025 = vmatpush.bf16.msra.mxu0 %v1016
        %1026 = vmatmul.bf16.gmra.mxu0 %v968
        %v1027 = vpop.f32.mrf.mxu0
        %v1028 = vadd.f32 0.0, %v1027
        %v1029 = vpop.f32.mrf.mxu0
        %v1030 = vadd.f32 0.0, %v1029
        %1031 = vmatmul.bf16.gmra.mxu0 %v971
        %v1032 = vpop.f32.mrf.mxu0
        %v1033 = vadd.f32 0.0, %v1032
        %v1034 = vpop.f32.mrf.mxu0
        %v1035 = vadd.f32 0.0, %v1034
        %1036 = vmatmul.bf16.gmra.mxu0 %v974
        %v1037 = vpop.f32.mrf.mxu0
        %v1038 = vadd.f32 0.0, %v1037
        %v1039 = vpop.f32.mrf.mxu0
        %v1040 = vadd.f32 0.0, %v1039
        %1041 = vmatmul.bf16.gmra.mxu0 %v977
        %v1042 = vpop.f32.mrf.mxu0
        %v1043 = vadd.f32 0.0, %v1042
        %v1044 = vpop.f32.mrf.mxu0
        %v1045 = vadd.f32 0.0, %v1044
        %1046 = vmatmul.bf16.gmra.mxu0 %v980
        %v1047 = vpop.f32.mrf.mxu0
        %v1048 = vadd.f32 0.0, %v1047
        %v1049 = vpop.f32.mrf.mxu0
        %v1050 = vadd.f32 0.0, %v1049
        %1051 = vmatmul.bf16.gmra.mxu0 %v983
        %v1052 = vpop.f32.mrf.mxu0
        %v1053 = vadd.f32 0.0, %v1052
        %v1054 = vpop.f32.mrf.mxu0
        %v1055 = vadd.f32 0.0, %v1054
        %1056 = vmatmul.bf16.gmra.mxu0 %v986
        %v1057 = vpop.f32.mrf.mxu0
        %v1058 = vadd.f32 0.0, %v1057
        %v1059 = vpop.f32.mrf.mxu0
        %v1060 = vadd.f32 0.0, %v1059
        %1061 = vmatmul.bf16.gmra.mxu0 %v989
        %v1062 = vpop.f32.mrf.mxu0
        %v1063 = vadd.f32 0.0, %v1062
        %v1064 = vpop.f32.mrf.mxu0
        %v1065 = vadd.f32 0.0, %v1064
        %1066 = vmatmul.bf16.gmra.mxu0 %v992
        %v1067 = vpop.f32.mrf.mxu0
        %v1068 = vadd.f32 0.0, %v1067
        %v1069 = vpop.f32.mrf.mxu0
        %v1070 = vadd.f32 0.0, %v1069
        %1071 = vmatmul.bf16.gmra.mxu0 %v995
        %v1072 = vpop.f32.mrf.mxu0
        %v1073 = vadd.f32 0.0, %v1072
        %v1074 = vpop.f32.mrf.mxu0
        %v1075 = vadd.f32 0.0, %v1074
        %1076 = vmatmul.bf16.gmra.mxu0 %v998
        %v1077 = vpop.f32.mrf.mxu0
        %v1078 = vadd.f32 0.0, %v1077
        %v1079 = vpop.f32.mrf.mxu0
        %v1080 = vadd.f32 0.0, %v1079
        %1081 = vmatmul.bf16.gmra.mxu0 %v1001
        %v1082 = vpop.f32.mrf.mxu0
        %v1083 = vadd.f32 0.0, %v1082
        %v1084 = vpop.f32.mrf.mxu0
        %v1085 = vadd.f32 0.0, %v1084
        %1086 = vmatmul.bf16.gmra.mxu0 %v1004
        %v1087 = vpop.f32.mrf.mxu0
        %v1088 = vadd.f32 0.0, %v1087
        %v1089 = vpop.f32.mrf.mxu0
        %v1090 = vadd.f32 0.0, %v1089
        %1091 = vmatmul.bf16.gmra.mxu0 %v1007
        %v1092 = vpop.f32.mrf.mxu0
        %v1093 = vadd.f32 0.0, %v1092
        %v1094 = vpop.f32.mrf.mxu0
        %v1095 = vadd.f32 0.0, %v1094
        %1096 = vmatmul.bf16.gmra.mxu0 %v1010
        %v1097 = vpop.f32.mrf.mxu0
        %v1098 = vadd.f32 0.0, %v1097
        %v1099 = vpop.f32.mrf.mxu0
        %v1100 = vadd.f32 0.0, %v1099
        %1101 = vmatmul.bf16.gmra.mxu0 %v1013
        %v1102 = vpop.f32.mrf.mxu0
        %v1103 = vadd.f32 0.0, %v1102
        %v1104 = vpop.f32.mrf.mxu0
        %v1105 = vadd.f32 0.0, %v1104
        %1106 = vdwg.mxu0
        %v1107 = vadd.f32 %v757, %v1028
        %v1108 = vadd.f32 %v759, %v1030
        %v1109 = vadd.f32 %v762, %v1033
        %v1110 = vadd.f32 %v764, %v1035
        %v1111 = vadd.f32 %v767, %v1038
        %v1112 = vadd.f32 %v769, %v1040
        %v1113 = vadd.f32 %v772, %v1043
        %v1114 = vadd.f32 %v774, %v1045
        %v1115 = vadd.f32 %v777, %v1048
        %v1116 = vadd.f32 %v779, %v1050
        %v1117 = vadd.f32 %v782, %v1053
        %v1118 = vadd.f32 %v784, %v1055
        %v1119 = vadd.f32 %v787, %v1058
        %v1120 = vadd.f32 %v789, %v1060
        %v1121 = vadd.f32 %v792, %v1063
        %v1122 = vadd.f32 %v794, %v1065
        %v1123 = vadd.f32 %v797, %v1068
        %v1124 = vadd.f32 %v799, %v1070
        %v1125 = vadd.f32 %v802, %v1073
        %v1126 = vadd.f32 %v804, %v1075
        %v1127 = vadd.f32 %v807, %v1078
        %v1128 = vadd.f32 %v809, %v1080
        %v1129 = vadd.f32 %v812, %v1083
        %v1130 = vadd.f32 %v814, %v1085
        %v1131 = vadd.f32 %v817, %v1088
        %v1132 = vadd.f32 %v819, %v1090
        %v1133 = vadd.f32 %v822, %v1093
        %v1134 = vadd.f32 %v824, %v1095
        %v1135 = vadd.f32 %v827, %v1098
        %v1136 = vadd.f32 %v829, %v1100
        %v1137 = vadd.f32 %v832, %v1103
        %v1138 = vadd.f32 %v834, %v1105
        %v1139 = vpack.c.bf16 %v353, %v352
        %s1140 = scalar_lea.vmem %s1, 6
        %v1141 = vld [vmem:[%s1140] sm:$0x3]
        %v1143 = vsel %vm554, %v1139, 0
        %v1146 = vsel %vm603, %v1141, 0
        %1148 = vmatpush.bf16.msra.mxu0 0
        %1149 = vmatpush.bf16.msra.mxu0 0
        %1150 = vmatpush.bf16.msra.mxu0 0
        %1151 = vmatpush.bf16.msra.mxu0 0
        %1152 = vmatpush.bf16.msra.mxu0 0
        %1153 = vmatpush.bf16.msra.mxu0 0
        %1154 = vmatpush.bf16.msra.mxu0 0
        %1155 = vmatpush.bf16.msra.mxu0 %v1146
        %1156 = vmatmul.bf16.gmra.mxu0 %v700
        %v1157 = vpop.f32.mrf.mxu0
        %v1158 = vadd.f32 0.0, %v1157
        %v1159 = vpop.f32.mrf.mxu0
        %v1160 = vadd.f32 0.0, %v1159
        %1161 = vmatmul.bf16.gmra.mxu0 %v703
        %v1162 = vpop.f32.mrf.mxu0
        %v1163 = vadd.f32 0.0, %v1162
        %v1164 = vpop.f32.mrf.mxu0
        %v1165 = vadd.f32 0.0, %v1164
        %1166 = vmatmul.bf16.gmra.mxu0 %v706
        %v1167 = vpop.f32.mrf.mxu0
        %v1168 = vadd.f32 0.0, %v1167
        %v1169 = vpop.f32.mrf.mxu0
        %v1170 = vadd.f32 0.0, %v1169
        %1171 = vmatmul.bf16.gmra.mxu0 %v709
        %v1172 = vpop.f32.mrf.mxu0
        %v1173 = vadd.f32 0.0, %v1172
        %v1174 = vpop.f32.mrf.mxu0
        %v1175 = vadd.f32 0.0, %v1174
        %1176 = vmatmul.bf16.gmra.mxu0 %v712
        %v1177 = vpop.f32.mrf.mxu0
        %v1178 = vadd.f32 0.0, %v1177
        %v1179 = vpop.f32.mrf.mxu0
        %v1180 = vadd.f32 0.0, %v1179
        %1181 = vmatmul.bf16.gmra.mxu0 %v715
        %v1182 = vpop.f32.mrf.mxu0
        %v1183 = vadd.f32 0.0, %v1182
        %v1184 = vpop.f32.mrf.mxu0
        %v1185 = vadd.f32 0.0, %v1184
        %1186 = vmatmul.bf16.gmra.mxu0 %v718
        %v1187 = vpop.f32.mrf.mxu0
        %v1188 = vadd.f32 0.0, %v1187
        %v1189 = vpop.f32.mrf.mxu0
        %v1190 = vadd.f32 0.0, %v1189
        %1191 = vmatmul.bf16.gmra.mxu0 %v721
        %v1192 = vpop.f32.mrf.mxu0
        %v1193 = vadd.f32 0.0, %v1192
        %v1194 = vpop.f32.mrf.mxu0
        %v1195 = vadd.f32 0.0, %v1194
        %1196 = vmatmul.bf16.gmra.mxu0 %v724
        %v1197 = vpop.f32.mrf.mxu0
        %v1198 = vadd.f32 0.0, %v1197
        %v1199 = vpop.f32.mrf.mxu0
        %v1200 = vadd.f32 0.0, %v1199
        %1201 = vmatmul.bf16.gmra.mxu0 %v727
        %v1202 = vpop.f32.mrf.mxu0
        %v1203 = vadd.f32 0.0, %v1202
        %v1204 = vpop.f32.mrf.mxu0
        %v1205 = vadd.f32 0.0, %v1204
        %1206 = vmatmul.bf16.gmra.mxu0 %v730
        %v1207 = vpop.f32.mrf.mxu0
        %v1208 = vadd.f32 0.0, %v1207
        %v1209 = vpop.f32.mrf.mxu0
        %v1210 = vadd.f32 0.0, %v1209
        %1211 = vmatmul.bf16.gmra.mxu0 %v733
        %v1212 = vpop.f32.mrf.mxu0
        %v1213 = vadd.f32 0.0, %v1212
        %v1214 = vpop.f32.mrf.mxu0
        %v1215 = vadd.f32 0.0, %v1214
        %1216 = vmatmul.bf16.gmra.mxu0 %v736
        %v1217 = vpop.f32.mrf.mxu0
        %v1218 = vadd.f32 0.0, %v1217
        %v1219 = vpop.f32.mrf.mxu0
        %v1220 = vadd.f32 0.0, %v1219
        %1221 = vmatmul.bf16.gmra.mxu0 %v739
        %v1222 = vpop.f32.mrf.mxu0
        %v1223 = vadd.f32 0.0, %v1222
        %v1224 = vpop.f32.mrf.mxu0
        %v1225 = vadd.f32 0.0, %v1224
        %1226 = vmatmul.bf16.gmra.mxu0 %v742
        %v1227 = vpop.f32.mrf.mxu0
        %v1228 = vadd.f32 0.0, %v1227
        %v1229 = vpop.f32.mrf.mxu0
        %v1230 = vadd.f32 0.0, %v1229
        %1231 = vmatmul.bf16.gmra.mxu0 %v1143
        %v1232 = vpop.f32.mrf.mxu0
        %v1233 = vadd.f32 0.0, %v1232
        %v1234 = vpop.f32.mrf.mxu0
        %v1235 = vadd.f32 0.0, %v1234
        %1236 = vdwg.mxu0
        %v1237 = vadd.f32 %v1107, %v1158
        %v1238 = vadd.f32 %v1108, %v1160
        %v1239 = vadd.f32 %v1109, %v1163
        %v1240 = vadd.f32 %v1110, %v1165
        %v1241 = vadd.f32 %v1111, %v1168
        %v1242 = vadd.f32 %v1112, %v1170
        %v1243 = vadd.f32 %v1113, %v1173
        %v1244 = vadd.f32 %v1114, %v1175
        %v1245 = vadd.f32 %v1115, %v1178
        %v1246 = vadd.f32 %v1116, %v1180
        %v1247 = vadd.f32 %v1117, %v1183
        %v1248 = vadd.f32 %v1118, %v1185
        %v1249 = vadd.f32 %v1119, %v1188
        %v1250 = vadd.f32 %v1120, %v1190
        %v1251 = vadd.f32 %v1121, %v1193
        %v1252 = vadd.f32 %v1122, %v1195
        %v1253 = vadd.f32 %v1123, %v1198
        %v1254 = vadd.f32 %v1124, %v1200
        %v1255 = vadd.f32 %v1125, %v1203
        %v1256 = vadd.f32 %v1126, %v1205
        %v1257 = vadd.f32 %v1127, %v1208
        %v1258 = vadd.f32 %v1128, %v1210
        %v1259 = vadd.f32 %v1129, %v1213
        %v1260 = vadd.f32 %v1130, %v1215
        %v1261 = vadd.f32 %v1131, %v1218
        %v1262 = vadd.f32 %v1132, %v1220
        %v1263 = vadd.f32 %v1133, %v1223
        %v1264 = vadd.f32 %v1134, %v1225
        %v1265 = vadd.f32 %v1135, %v1228
        %v1266 = vadd.f32 %v1136, %v1230
        %v1267 = vadd.f32 %v1137, %v1233
        %v1268 = vadd.f32 %v1138, %v1235
        %v1272 = vrot.slane %v352, 1
        %v1273 = vrot.slane %v353, 1
        %v1274 = vsel %vm423, %v1272, %v1273
        %v1275 = vrot.slane %v354, 1
        %v1276 = vsel %vm423, %v1273, %v1275
        %v1279 = vpack.c.bf16 %v1276, %v1274
        %s1280 = scalar_lea.vmem %s1, 8
        %v1281 = vld [vmem:[%s1280] sm:$0x3]
        %v1283 = vsel %vm554, %v1279, 0
        %v1286 = vsel %vm603, %v1281, 0
        %1288 = vmatpush.bf16.msra.mxu0 0
        %1289 = vmatpush.bf16.msra.mxu0 0
        %1290 = vmatpush.bf16.msra.mxu0 0
        %1291 = vmatpush.bf16.msra.mxu0 0
        %1292 = vmatpush.bf16.msra.mxu0 0
        %1293 = vmatpush.bf16.msra.mxu0 0
        %1294 = vmatpush.bf16.msra.mxu0 0
        %1295 = vmatpush.bf16.msra.mxu0 %v1286
        %1296 = vmatmul.bf16.gmra.mxu0 %v559
        %v1297 = vpop.f32.mrf.mxu0
        %v1298 = vadd.f32 0.0, %v1297
        %v1299 = vpop.f32.mrf.mxu0
        %v1300 = vadd.f32 0.0, %v1299
        %1301 = vmatmul.bf16.gmra.mxu0 %v562
        %v1302 = vpop.f32.mrf.mxu0
        %v1303 = vadd.f32 0.0, %v1302
        %v1304 = vpop.f32.mrf.mxu0
        %v1305 = vadd.f32 0.0, %v1304
        %1306 = vmatmul.bf16.gmra.mxu0 %v565
        %v1307 = vpop.f32.mrf.mxu0
        %v1308 = vadd.f32 0.0, %v1307
        %v1309 = vpop.f32.mrf.mxu0
        %v1310 = vadd.f32 0.0, %v1309
        %1311 = vmatmul.bf16.gmra.mxu0 %v568
        %v1312 = vpop.f32.mrf.mxu0
        %v1313 = vadd.f32 0.0, %v1312
        %v1314 = vpop.f32.mrf.mxu0
        %v1315 = vadd.f32 0.0, %v1314
        %1316 = vmatmul.bf16.gmra.mxu0 %v571
        %v1317 = vpop.f32.mrf.mxu0
        %v1318 = vadd.f32 0.0, %v1317
        %v1319 = vpop.f32.mrf.mxu0
        %v1320 = vadd.f32 0.0, %v1319
        %1321 = vmatmul.bf16.gmra.mxu0 %v574
        %v1322 = vpop.f32.mrf.mxu0
        %v1323 = vadd.f32 0.0, %v1322
        %v1324 = vpop.f32.mrf.mxu0
        %v1325 = vadd.f32 0.0, %v1324
        %1326 = vmatmul.bf16.gmra.mxu0 %v577
        %v1327 = vpop.f32.mrf.mxu0
        %v1328 = vadd.f32 0.0, %v1327
        %v1329 = vpop.f32.mrf.mxu0
        %v1330 = vadd.f32 0.0, %v1329
        %1331 = vmatmul.bf16.gmra.mxu0 %v580
        %v1332 = vpop.f32.mrf.mxu0
        %v1333 = vadd.f32 0.0, %v1332
        %v1334 = vpop.f32.mrf.mxu0
        %v1335 = vadd.f32 0.0, %v1334
        %1336 = vmatmul.bf16.gmra.mxu0 %v583
        %v1337 = vpop.f32.mrf.mxu0
        %v1338 = vadd.f32 0.0, %v1337
        %v1339 = vpop.f32.mrf.mxu0
        %v1340 = vadd.f32 0.0, %v1339
        %1341 = vmatmul.bf16.gmra.mxu0 %v586
        %v1342 = vpop.f32.mrf.mxu0
        %v1343 = vadd.f32 0.0, %v1342
        %v1344 = vpop.f32.mrf.mxu0
        %v1345 = vadd.f32 0.0, %v1344
        %1346 = vmatmul.bf16.gmra.mxu0 %v589
        %v1347 = vpop.f32.mrf.mxu0
        %v1348 = vadd.f32 0.0, %v1347
        %v1349 = vpop.f32.mrf.mxu0
        %v1350 = vadd.f32 0.0, %v1349
        %1351 = vmatmul.bf16.gmra.mxu0 %v592
        %v1352 = vpop.f32.mrf.mxu0
        %v1353 = vadd.f32 0.0, %v1352
        %v1354 = vpop.f32.mrf.mxu0
        %v1355 = vadd.f32 0.0, %v1354
        %1356 = vmatmul.bf16.gmra.mxu0 %v595
        %v1357 = vpop.f32.mrf.mxu0
        %v1358 = vadd.f32 0.0, %v1357
        %v1359 = vpop.f32.mrf.mxu0
        %v1360 = vadd.f32 0.0, %v1359
        %1361 = vmatmul.bf16.gmra.mxu0 %v598
        %v1362 = vpop.f32.mrf.mxu0
        %v1363 = vadd.f32 0.0, %v1362
        %v1364 = vpop.f32.mrf.mxu0
        %v1365 = vadd.f32 0.0, %v1364
        %1366 = vmatmul.bf16.gmra.mxu0 %v601
        %v1367 = vpop.f32.mrf.mxu0
        %v1368 = vadd.f32 0.0, %v1367
        %v1369 = vpop.f32.mrf.mxu0
        %v1370 = vadd.f32 0.0, %v1369
        %1371 = vmatmul.bf16.gmra.mxu0 %v1283
        %v1372 = vpop.f32.mrf.mxu0
        %v1373 = vadd.f32 0.0, %v1372
        %v1374 = vpop.f32.mrf.mxu0
        %v1375 = vadd.f32 0.0, %v1374
        %1376 = vdwg.mxu0
        %v1377 = vadd.f32 %v1237, %v1298
        %v1378 = vadd.f32 %v1238, %v1300
        %v1379 = vadd.f32 %v1239, %v1303
        %v1380 = vadd.f32 %v1240, %v1305
        %v1381 = vadd.f32 %v1241, %v1308
        %v1382 = vadd.f32 %v1242, %v1310
        %v1383 = vadd.f32 %v1243, %v1313
        %v1384 = vadd.f32 %v1244, %v1315
        %v1385 = vadd.f32 %v1245, %v1318
        %v1386 = vadd.f32 %v1246, %v1320
        %v1387 = vadd.f32 %v1247, %v1323
        %v1388 = vadd.f32 %v1248, %v1325
        %v1389 = vadd.f32 %v1249, %v1328
        %v1390 = vadd.f32 %v1250, %v1330
        %v1391 = vadd.f32 %v1251, %v1333
        %v1392 = vadd.f32 %v1252, %v1335
        %v1393 = vadd.f32 %v1253, %v1338
        %v1394 = vadd.f32 %v1254, %v1340
        %v1395 = vadd.f32 %v1255, %v1343
        %v1396 = vadd.f32 %v1256, %v1345
        %v1397 = vadd.f32 %v1257, %v1348
        %v1398 = vadd.f32 %v1258, %v1350
        %v1399 = vadd.f32 %v1259, %v1353
        %v1400 = vadd.f32 %v1260, %v1355
        %v1401 = vadd.f32 %v1261, %v1358
        %v1402 = vadd.f32 %v1262, %v1360
        %v1403 = vadd.f32 %v1263, %v1363
        %v1404 = vadd.f32 %v1264, %v1365
        %v1405 = vadd.f32 %v1265, %v1368
        %v1406 = vadd.f32 %v1266, %v1370
        %v1407 = vadd.f32 %v1267, %v1373
        %v1408 = vadd.f32 %v1268, %v1375
        %v1409 = vrot.slane %v352, 2
        %v1410 = vrot.slane %v353, 2
        %v1411 = vsel %vm836, %v1409, %v1410
        %v1412 = vrot.slane %v354, 2
        %v1413 = vsel %vm836, %v1410, %v1412
        %v1416 = vpack.c.bf16 %v1413, %v1411
        %s1417 = scalar_lea.vmem %s1, 10
        %v1418 = vld [vmem:[%s1417] sm:$0x3]
        %v1420 = vsel %vm554, %v1416, 0
        %v1423 = vsel %vm603, %v1418, 0
        %1425 = vmatpush.bf16.msra.mxu0 0
        %1426 = vmatpush.bf16.msra.mxu0 0
        %1427 = vmatpush.bf16.msra.mxu0 0
        %1428 = vmatpush.bf16.msra.mxu0 0
        %1429 = vmatpush.bf16.msra.mxu0 0
        %1430 = vmatpush.bf16.msra.mxu0 0
        %1431 = vmatpush.bf16.msra.mxu0 0
        %1432 = vmatpush.bf16.msra.mxu0 %v1423
        %1433 = vmatmul.bf16.gmra.mxu0 %v971
        %v1434 = vpop.f32.mrf.mxu0
        %v1435 = vadd.f32 0.0, %v1434
        %v1436 = vpop.f32.mrf.mxu0
        %v1437 = vadd.f32 0.0, %v1436
        %1438 = vmatmul.bf16.gmra.mxu0 %v974
        %v1439 = vpop.f32.mrf.mxu0
        %v1440 = vadd.f32 0.0, %v1439
        %v1441 = vpop.f32.mrf.mxu0
        %v1442 = vadd.f32 0.0, %v1441
        %1443 = vmatmul.bf16.gmra.mxu0 %v977
        %v1444 = vpop.f32.mrf.mxu0
        %v1445 = vadd.f32 0.0, %v1444
        %v1446 = vpop.f32.mrf.mxu0
        %v1447 = vadd.f32 0.0, %v1446
        %1448 = vmatmul.bf16.gmra.mxu0 %v980
        %v1449 = vpop.f32.mrf.mxu0
        %v1450 = vadd.f32 0.0, %v1449
        %v1451 = vpop.f32.mrf.mxu0
        %v1452 = vadd.f32 0.0, %v1451
        %1453 = vmatmul.bf16.gmra.mxu0 %v983
        %v1454 = vpop.f32.mrf.mxu0
        %v1455 = vadd.f32 0.0, %v1454
        %v1456 = vpop.f32.mrf.mxu0
        %v1457 = vadd.f32 0.0, %v1456
        %1458 = vmatmul.bf16.gmra.mxu0 %v986
        %v1459 = vpop.f32.mrf.mxu0
        %v1460 = vadd.f32 0.0, %v1459
        %v1461 = vpop.f32.mrf.mxu0
        %v1462 = vadd.f32 0.0, %v1461
        %1463 = vmatmul.bf16.gmra.mxu0 %v989
        %v1464 = vpop.f32.mrf.mxu0
        %v1465 = vadd.f32 0.0, %v1464
        %v1466 = vpop.f32.mrf.mxu0
        %v1467 = vadd.f32 0.0, %v1466
        %1468 = vmatmul.bf16.gmra.mxu0 %v992
        %v1469 = vpop.f32.mrf.mxu0
        %v1470 = vadd.f32 0.0, %v1469
        %v1471 = vpop.f32.mrf.mxu0
        %v1472 = vadd.f32 0.0, %v1471
        %1473 = vmatmul.bf16.gmra.mxu0 %v995
        %v1474 = vpop.f32.mrf.mxu0
        %v1475 = vadd.f32 0.0, %v1474
        %v1476 = vpop.f32.mrf.mxu0
        %v1477 = vadd.f32 0.0, %v1476
        %1478 = vmatmul.bf16.gmra.mxu0 %v998
        %v1479 = vpop.f32.mrf.mxu0
        %v1480 = vadd.f32 0.0, %v1479
        %v1481 = vpop.f32.mrf.mxu0
        %v1482 = vadd.f32 0.0, %v1481
        %1483 = vmatmul.bf16.gmra.mxu0 %v1001
        %v1484 = vpop.f32.mrf.mxu0
        %v1485 = vadd.f32 0.0, %v1484
        %v1486 = vpop.f32.mrf.mxu0
        %v1487 = vadd.f32 0.0, %v1486
        %1488 = vmatmul.bf16.gmra.mxu0 %v1004
        %v1489 = vpop.f32.mrf.mxu0
        %v1490 = vadd.f32 0.0, %v1489
        %v1491 = vpop.f32.mrf.mxu0
        %v1492 = vadd.f32 0.0, %v1491
        %1493 = vmatmul.bf16.gmra.mxu0 %v1007
        %v1494 = vpop.f32.mrf.mxu0
        %v1495 = vadd.f32 0.0, %v1494
        %v1496 = vpop.f32.mrf.mxu0
        %v1497 = vadd.f32 0.0, %v1496
        %1498 = vmatmul.bf16.gmra.mxu0 %v1010
        %v1499 = vpop.f32.mrf.mxu0
        %v1500 = vadd.f32 0.0, %v1499
        %v1501 = vpop.f32.mrf.mxu0
        %v1502 = vadd.f32 0.0, %v1501
        %1503 = vmatmul.bf16.gmra.mxu0 %v1013
        %v1504 = vpop.f32.mrf.mxu0
        %v1505 = vadd.f32 0.0, %v1504
        %v1506 = vpop.f32.mrf.mxu0
        %v1507 = vadd.f32 0.0, %v1506
        %1508 = vmatmul.bf16.gmra.mxu0 %v1420
        %v1509 = vpop.f32.mrf.mxu0
        %v1510 = vadd.f32 0.0, %v1509
        %v1511 = vpop.f32.mrf.mxu0
        %v1512 = vadd.f32 0.0, %v1511
        %1513 = vdwg.mxu0
        %v1514 = vadd.f32 %v1377, %v1435
        %v1515 = vadd.f32 %v1378, %v1437
        %v1516 = vadd.f32 %v1379, %v1440
        %v1517 = vadd.f32 %v1380, %v1442
        %v1518 = vadd.f32 %v1381, %v1445
        %v1519 = vadd.f32 %v1382, %v1447
        %v1520 = vadd.f32 %v1383, %v1450
        %v1521 = vadd.f32 %v1384, %v1452
        %v1522 = vadd.f32 %v1385, %v1455
        %v1523 = vadd.f32 %v1386, %v1457
        %v1524 = vadd.f32 %v1387, %v1460
        %v1525 = vadd.f32 %v1388, %v1462
        %v1526 = vadd.f32 %v1389, %v1465
        %v1527 = vadd.f32 %v1390, %v1467
        %v1528 = vadd.f32 %v1391, %v1470
        %v1529 = vadd.f32 %v1392, %v1472
        %v1530 = vadd.f32 %v1393, %v1475
        %v1531 = vadd.f32 %v1394, %v1477
        %v1532 = vadd.f32 %v1395, %v1480
        %v1533 = vadd.f32 %v1396, %v1482
        %v1534 = vadd.f32 %v1397, %v1485
        %v1535 = vadd.f32 %v1398, %v1487
        %v1536 = vadd.f32 %v1399, %v1490
        %v1537 = vadd.f32 %v1400, %v1492
        %v1538 = vadd.f32 %v1401, %v1495
        %v1539 = vadd.f32 %v1402, %v1497
        %v1540 = vadd.f32 %v1403, %v1500
        %v1541 = vadd.f32 %v1404, %v1502
        %v1542 = vadd.f32 %v1405, %v1505
        %v1543 = vadd.f32 %v1406, %v1507
        %v1544 = vadd.f32 %v1407, %v1510
        %v1545 = vadd.f32 %v1408, %v1512
        %v1546 = vpack.c.bf16 %v356, %v355
        %s1547 = scalar_lea.vmem %s1, 12
        %v1548 = vld [vmem:[%s1547] sm:$0x3]
        %v1550 = vsel %vm554, %v1546, 0
        %v1553 = vsel %vm603, %v1548, 0
        %1555 = vmatpush.bf16.msra.mxu0 0
        %1556 = vmatpush.bf16.msra.mxu0 0
        %1557 = vmatpush.bf16.msra.mxu0 0
        %1558 = vmatpush.bf16.msra.mxu0 0
        %1559 = vmatpush.bf16.msra.mxu0 0
        %1560 = vmatpush.bf16.msra.mxu0 0
        %1561 = vmatpush.bf16.msra.mxu0 0
        %1562 = vmatpush.bf16.msra.mxu0 %v1553
        %1563 = vmatmul.bf16.gmra.mxu0 %v703
        %v1564 = vpop.f32.mrf.mxu0
        %v1565 = vadd.f32 0.0, %v1564
        %v1566 = vpop.f32.mrf.mxu0
        %v1567 = vadd.f32 0.0, %v1566
        %1568 = vmatmul.bf16.gmra.mxu0 %v706
        %v1569 = vpop.f32.mrf.mxu0
        %v1570 = vadd.f32 0.0, %v1569
        %v1571 = vpop.f32.mrf.mxu0
        %v1572 = vadd.f32 0.0, %v1571
        %1573 = vmatmul.bf16.gmra.mxu0 %v709
        %v1574 = vpop.f32.mrf.mxu0
        %v1575 = vadd.f32 0.0, %v1574
        %v1576 = vpop.f32.mrf.mxu0
        %v1577 = vadd.f32 0.0, %v1576
        %1578 = vmatmul.bf16.gmra.mxu0 %v712
        %v1579 = vpop.f32.mrf.mxu0
        %v1580 = vadd.f32 0.0, %v1579
        %v1581 = vpop.f32.mrf.mxu0
        %v1582 = vadd.f32 0.0, %v1581
        %1583 = vmatmul.bf16.gmra.mxu0 %v715
        %v1584 = vpop.f32.mrf.mxu0
        %v1585 = vadd.f32 0.0, %v1584
        %v1586 = vpop.f32.mrf.mxu0
        %v1587 = vadd.f32 0.0, %v1586
        %1588 = vmatmul.bf16.gmra.mxu0 %v718
        %v1589 = vpop.f32.mrf.mxu0
        %v1590 = vadd.f32 0.0, %v1589
        %v1591 = vpop.f32.mrf.mxu0
        %v1592 = vadd.f32 0.0, %v1591
        %1593 = vmatmul.bf16.gmra.mxu0 %v721
        %v1594 = vpop.f32.mrf.mxu0
        %v1595 = vadd.f32 0.0, %v1594
        %v1596 = vpop.f32.mrf.mxu0
        %v1597 = vadd.f32 0.0, %v1596
        %1598 = vmatmul.bf16.gmra.mxu0 %v724
        %v1599 = vpop.f32.mrf.mxu0
        %v1600 = vadd.f32 0.0, %v1599
        %v1601 = vpop.f32.mrf.mxu0
        %v1602 = vadd.f32 0.0, %v1601
        %1603 = vmatmul.bf16.gmra.mxu0 %v727
        %v1604 = vpop.f32.mrf.mxu0
        %v1605 = vadd.f32 0.0, %v1604
        %v1606 = vpop.f32.mrf.mxu0
        %v1607 = vadd.f32 0.0, %v1606
        %1608 = vmatmul.bf16.gmra.mxu0 %v730
        %v1609 = vpop.f32.mrf.mxu0
        %v1610 = vadd.f32 0.0, %v1609
        %v1611 = vpop.f32.mrf.mxu0
        %v1612 = vadd.f32 0.0, %v1611
        %1613 = vmatmul.bf16.gmra.mxu0 %v733
        %v1614 = vpop.f32.mrf.mxu0
        %v1615 = vadd.f32 0.0, %v1614
        %v1616 = vpop.f32.mrf.mxu0
        %v1617 = vadd.f32 0.0, %v1616
        %1618 = vmatmul.bf16.gmra.mxu0 %v736
        %v1619 = vpop.f32.mrf.mxu0
        %v1620 = vadd.f32 0.0, %v1619
        %v1621 = vpop.f32.mrf.mxu0
        %v1622 = vadd.f32 0.0, %v1621
        %1623 = vmatmul.bf16.gmra.mxu0 %v739
        %v1624 = vpop.f32.mrf.mxu0
        %v1625 = vadd.f32 0.0, %v1624
        %v1626 = vpop.f32.mrf.mxu0
        %v1627 = vadd.f32 0.0, %v1626
        %1628 = vmatmul.bf16.gmra.mxu0 %v742
        %v1629 = vpop.f32.mrf.mxu0
        %v1630 = vadd.f32 0.0, %v1629
        %v1631 = vpop.f32.mrf.mxu0
        %v1632 = vadd.f32 0.0, %v1631
        %1633 = vmatmul.bf16.gmra.mxu0 %v1143
        %v1634 = vpop.f32.mrf.mxu0
        %v1635 = vadd.f32 0.0, %v1634
        %v1636 = vpop.f32.mrf.mxu0
        %v1637 = vadd.f32 0.0, %v1636
        %1638 = vmatmul.bf16.gmra.mxu0 %v1550
        %v1639 = vpop.f32.mrf.mxu0
        %v1640 = vadd.f32 0.0, %v1639
        %v1641 = vpop.f32.mrf.mxu0
        %v1642 = vadd.f32 0.0, %v1641
        %1643 = vdwg.mxu0
        %v1644 = vadd.f32 %v1514, %v1565
        %v1645 = vadd.f32 %v1515, %v1567
        %v1646 = vadd.f32 %v1516, %v1570
        %v1647 = vadd.f32 %v1517, %v1572
        %v1648 = vadd.f32 %v1518, %v1575
        %v1649 = vadd.f32 %v1519, %v1577
        %v1650 = vadd.f32 %v1520, %v1580
        %v1651 = vadd.f32 %v1521, %v1582
        %v1652 = vadd.f32 %v1522, %v1585
        %v1653 = vadd.f32 %v1523, %v1587
        %v1654 = vadd.f32 %v1524, %v1590
        %v1655 = vadd.f32 %v1525, %v1592
        %v1656 = vadd.f32 %v1526, %v1595
        %v1657 = vadd.f32 %v1527, %v1597
        %v1658 = vadd.f32 %v1528, %v1600
        %v1659 = vadd.f32 %v1529, %v1602
        %v1660 = vadd.f32 %v1530, %v1605
        %v1661 = vadd.f32 %v1531, %v1607
        %v1662 = vadd.f32 %v1532, %v1610
        %v1663 = vadd.f32 %v1533, %v1612
        %v1664 = vadd.f32 %v1534, %v1615
        %v1665 = vadd.f32 %v1535, %v1617
        %v1666 = vadd.f32 %v1536, %v1620
        %v1667 = vadd.f32 %v1537, %v1622
        %v1668 = vadd.f32 %v1538, %v1625
        %v1669 = vadd.f32 %v1539, %v1627
        %v1670 = vadd.f32 %v1540, %v1630
        %v1671 = vadd.f32 %v1541, %v1632
        %v1672 = vadd.f32 %v1542, %v1635
        %v1673 = vadd.f32 %v1543, %v1637
        %v1674 = vadd.f32 %v1544, %v1640
        %v1675 = vadd.f32 %v1545, %v1642
        %v1679 = vrot.slane %v355, 1
        %v1680 = vrot.slane %v356, 1
        %v1681 = vsel %vm423, %v1679, %v1680
        %v1682 = vrot.slane %v357, 1
        %v1683 = vsel %vm423, %v1680, %v1682
        %v1686 = vpack.c.bf16 %v1683, %v1681
        %s1687 = scalar_lea.vmem %s1, 14
        %v1688 = vld [vmem:[%s1687] sm:$0x3]
        %v1690 = vsel %vm554, %v1686, 0
        %v1693 = vsel %vm603, %v1688, 0
        %1695 = vmatpush.bf16.msra.mxu0 0
        %1696 = vmatpush.bf16.msra.mxu0 0
        %1697 = vmatpush.bf16.msra.mxu0 0
        %1698 = vmatpush.bf16.msra.mxu0 0
        %1699 = vmatpush.bf16.msra.mxu0 0
        %1700 = vmatpush.bf16.msra.mxu0 0
        %1701 = vmatpush.bf16.msra.mxu0 0
        %1702 = vmatpush.bf16.msra.mxu0 %v1693
        %1703 = vmatmul.bf16.gmra.mxu0 %v562
        %v1704 = vpop.f32.mrf.mxu0
        %v1705 = vadd.f32 0.0, %v1704
        %v1706 = vpop.f32.mrf.mxu0
        %v1707 = vadd.f32 0.0, %v1706
        %1708 = vmatmul.bf16.gmra.mxu0 %v565
        %v1709 = vpop.f32.mrf.mxu0
        %v1710 = vadd.f32 0.0, %v1709
        %v1711 = vpop.f32.mrf.mxu0
        %v1712 = vadd.f32 0.0, %v1711
        %1713 = vmatmul.bf16.gmra.mxu0 %v568
        %v1714 = vpop.f32.mrf.mxu0
        %v1715 = vadd.f32 0.0, %v1714
        %v1716 = vpop.f32.mrf.mxu0
        %v1717 = vadd.f32 0.0, %v1716
        %1718 = vmatmul.bf16.gmra.mxu0 %v571
        %v1719 = vpop.f32.mrf.mxu0
        %v1720 = vadd.f32 0.0, %v1719
        %v1721 = vpop.f32.mrf.mxu0
        %v1722 = vadd.f32 0.0, %v1721
        %1723 = vmatmul.bf16.gmra.mxu0 %v574
        %v1724 = vpop.f32.mrf.mxu0
        %v1725 = vadd.f32 0.0, %v1724
        %v1726 = vpop.f32.mrf.mxu0
        %v1727 = vadd.f32 0.0, %v1726
        %1728 = vmatmul.bf16.gmra.mxu0 %v577
        %v1729 = vpop.f32.mrf.mxu0
        %v1730 = vadd.f32 0.0, %v1729
        %v1731 = vpop.f32.mrf.mxu0
        %v1732 = vadd.f32 0.0, %v1731
        %1733 = vmatmul.bf16.gmra.mxu0 %v580
        %v1734 = vpop.f32.mrf.mxu0
        %v1735 = vadd.f32 0.0, %v1734
        %v1736 = vpop.f32.mrf.mxu0
        %v1737 = vadd.f32 0.0, %v1736
        %1738 = vmatmul.bf16.gmra.mxu0 %v583
        %v1739 = vpop.f32.mrf.mxu0
        %v1740 = vadd.f32 0.0, %v1739
        %v1741 = vpop.f32.mrf.mxu0
        %v1742 = vadd.f32 0.0, %v1741
        %1743 = vmatmul.bf16.gmra.mxu0 %v586
        %v1744 = vpop.f32.mrf.mxu0
        %v1745 = vadd.f32 0.0, %v1744
        %v1746 = vpop.f32.mrf.mxu0
        %v1747 = vadd.f32 0.0, %v1746
        %1748 = vmatmul.bf16.gmra.mxu0 %v589
        %v1749 = vpop.f32.mrf.mxu0
        %v1750 = vadd.f32 0.0, %v1749
        %v1751 = vpop.f32.mrf.mxu0
        %v1752 = vadd.f32 0.0, %v1751
        %1753 = vmatmul.bf16.gmra.mxu0 %v592
        %v1754 = vpop.f32.mrf.mxu0
        %v1755 = vadd.f32 0.0, %v1754
        %v1756 = vpop.f32.mrf.mxu0
        %v1757 = vadd.f32 0.0, %v1756
        %1758 = vmatmul.bf16.gmra.mxu0 %v595
        %v1759 = vpop.f32.mrf.mxu0
        %v1760 = vadd.f32 0.0, %v1759
        %v1761 = vpop.f32.mrf.mxu0
        %v1762 = vadd.f32 0.0, %v1761
        %1763 = vmatmul.bf16.gmra.mxu0 %v598
        %v1764 = vpop.f32.mrf.mxu0
        %v1765 = vadd.f32 0.0, %v1764
        %v1766 = vpop.f32.mrf.mxu0
        %v1767 = vadd.f32 0.0, %v1766
        %1768 = vmatmul.bf16.gmra.mxu0 %v601
        %v1769 = vpop.f32.mrf.mxu0
        %v1770 = vadd.f32 0.0, %v1769
        %v1771 = vpop.f32.mrf.mxu0
        %v1772 = vadd.f32 0.0, %v1771
        %1773 = vmatmul.bf16.gmra.mxu0 %v1283
        %v1774 = vpop.f32.mrf.mxu0
        %v1775 = vadd.f32 0.0, %v1774
        %v1776 = vpop.f32.mrf.mxu0
        %v1777 = vadd.f32 0.0, %v1776
        %1778 = vmatmul.bf16.gmra.mxu0 %v1690
        %v1779 = vpop.f32.mrf.mxu0
        %v1780 = vadd.f32 0.0, %v1779
        %v1781 = vpop.f32.mrf.mxu0
        %v1782 = vadd.f32 0.0, %v1781
        %1783 = vdwg.mxu0
        %v1784 = vadd.f32 %v1644, %v1705
        %v1785 = vadd.f32 %v1645, %v1707
        %v1786 = vadd.f32 %v1646, %v1710
        %v1787 = vadd.f32 %v1647, %v1712
        %v1788 = vadd.f32 %v1648, %v1715
        %v1789 = vadd.f32 %v1649, %v1717
        %v1790 = vadd.f32 %v1650, %v1720
        %v1791 = vadd.f32 %v1651, %v1722
        %v1792 = vadd.f32 %v1652, %v1725
        %v1793 = vadd.f32 %v1653, %v1727
        %v1794 = vadd.f32 %v1654, %v1730
        %v1795 = vadd.f32 %v1655, %v1732
        %v1796 = vadd.f32 %v1656, %v1735
        %v1797 = vadd.f32 %v1657, %v1737
        %v1798 = vadd.f32 %v1658, %v1740
        %v1799 = vadd.f32 %v1659, %v1742
        %v1800 = vadd.f32 %v1660, %v1745
        %v1801 = vadd.f32 %v1661, %v1747
        %v1802 = vadd.f32 %v1662, %v1750
        %v1803 = vadd.f32 %v1663, %v1752
        %v1804 = vadd.f32 %v1664, %v1755
        %v1805 = vadd.f32 %v1665, %v1757
        %v1806 = vadd.f32 %v1666, %v1760
        %v1807 = vadd.f32 %v1667, %v1762
        %v1808 = vadd.f32 %v1668, %v1765
        %v1809 = vadd.f32 %v1669, %v1767
        %v1810 = vadd.f32 %v1670, %v1770
        %v1811 = vadd.f32 %v1671, %v1772
        %v1812 = vadd.f32 %v1672, %v1775
        %v1813 = vadd.f32 %v1673, %v1777
        %v1814 = vadd.f32 %v1674, %v1780
        %v1815 = vadd.f32 %v1675, %v1782
        %v1816 = vrot.slane %v355, 2
        %v1817 = vrot.slane %v356, 2
        %v1818 = vsel %vm836, %v1816, %v1817
        %v1819 = vrot.slane %v357, 2
        %v1820 = vsel %vm836, %v1817, %v1819
        %v1823 = vpack.c.bf16 %v1820, %v1818
        %s1824 = scalar_lea.vmem %s1, 16
        %v1825 = vld [vmem:[%s1824] sm:$0x3]
        %v1827 = vsel %vm554, %v1823, 0
        %v1830 = vsel %vm603, %v1825, 0
        %1832 = vmatpush.bf16.msra.mxu0 0
        %1833 = vmatpush.bf16.msra.mxu0 0
        %1834 = vmatpush.bf16.msra.mxu0 0
        %1835 = vmatpush.bf16.msra.mxu0 0
        %1836 = vmatpush.bf16.msra.mxu0 0
        %1837 = vmatpush.bf16.msra.mxu0 0
        %1838 = vmatpush.bf16.msra.mxu0 0
        %1839 = vmatpush.bf16.msra.mxu0 %v1830
        %1840 = vmatmul.bf16.gmra.mxu0 %v974
        %v1841 = vpop.f32.mrf.mxu0
        %v1842 = vadd.f32 0.0, %v1841
        %v1843 = vpop.f32.mrf.mxu0
        %v1844 = vadd.f32 0.0, %v1843
        %1845 = vmatmul.bf16.gmra.mxu0 %v977
        %v1846 = vpop.f32.mrf.mxu0
        %v1847 = vadd.f32 0.0, %v1846
        %v1848 = vpop.f32.mrf.mxu0
        %v1849 = vadd.f32 0.0, %v1848
        %1850 = vmatmul.bf16.gmra.mxu0 %v980
        %v1851 = vpop.f32.mrf.mxu0
        %v1852 = vadd.f32 0.0, %v1851
        %v1853 = vpop.f32.mrf.mxu0
        %v1854 = vadd.f32 0.0, %v1853
        %1855 = vmatmul.bf16.gmra.mxu0 %v983
        %v1856 = vpop.f32.mrf.mxu0
        %v1857 = vadd.f32 0.0, %v1856
        %v1858 = vpop.f32.mrf.mxu0
        %v1859 = vadd.f32 0.0, %v1858
        %1860 = vmatmul.bf16.gmra.mxu0 %v986
        %v1861 = vpop.f32.mrf.mxu0
        %v1862 = vadd.f32 0.0, %v1861
        %v1863 = vpop.f32.mrf.mxu0
        %v1864 = vadd.f32 0.0, %v1863
        %1865 = vmatmul.bf16.gmra.mxu0 %v989
        %v1866 = vpop.f32.mrf.mxu0
        %v1867 = vadd.f32 0.0, %v1866
        %v1868 = vpop.f32.mrf.mxu0
        %v1869 = vadd.f32 0.0, %v1868
        %1870 = vmatmul.bf16.gmra.mxu0 %v992
        %v1871 = vpop.f32.mrf.mxu0
        %v1872 = vadd.f32 0.0, %v1871
        %v1873 = vpop.f32.mrf.mxu0
        %v1874 = vadd.f32 0.0, %v1873
        %1875 = vmatmul.bf16.gmra.mxu0 %v995
        %v1876 = vpop.f32.mrf.mxu0
        %v1877 = vadd.f32 0.0, %v1876
        %v1878 = vpop.f32.mrf.mxu0
        %v1879 = vadd.f32 0.0, %v1878
        %1880 = vmatmul.bf16.gmra.mxu0 %v998
        %v1881 = vpop.f32.mrf.mxu0
        %v1882 = vadd.f32 0.0, %v1881
        %v1883 = vpop.f32.mrf.mxu0
        %v1884 = vadd.f32 0.0, %v1883
        %1885 = vmatmul.bf16.gmra.mxu0 %v1001
        %v1886 = vpop.f32.mrf.mxu0
        %v1887 = vadd.f32 0.0, %v1886
        %v1888 = vpop.f32.mrf.mxu0
        %v1889 = vadd.f32 0.0, %v1888
        %1890 = vmatmul.bf16.gmra.mxu0 %v1004
        %v1891 = vpop.f32.mrf.mxu0
        %v1892 = vadd.f32 0.0, %v1891
        %v1893 = vpop.f32.mrf.mxu0
        %v1894 = vadd.f32 0.0, %v1893
        %1895 = vmatmul.bf16.gmra.mxu0 %v1007
        %v1896 = vpop.f32.mrf.mxu0
        %v1897 = vadd.f32 0.0, %v1896
        %v1898 = vpop.f32.mrf.mxu0
        %v1899 = vadd.f32 0.0, %v1898
        %1900 = vmatmul.bf16.gmra.mxu0 %v1010
        %v1901 = vpop.f32.mrf.mxu0
        %v1902 = vadd.f32 0.0, %v1901
        %v1903 = vpop.f32.mrf.mxu0
        %v1904 = vadd.f32 0.0, %v1903
        %1905 = vmatmul.bf16.gmra.mxu0 %v1013
        %v1906 = vpop.f32.mrf.mxu0
        %v1907 = vadd.f32 0.0, %v1906
        %v1908 = vpop.f32.mrf.mxu0
        %v1909 = vadd.f32 0.0, %v1908
        %1910 = vmatmul.bf16.gmra.mxu0 %v1420
        %v1911 = vpop.f32.mrf.mxu0
        %v1912 = vadd.f32 0.0, %v1911
        %v1913 = vpop.f32.mrf.mxu0
        %v1914 = vadd.f32 0.0, %v1913
        %1915 = vmatmul.bf16.gmra.mxu0 %v1827
        %v1916 = vpop.f32.mrf.mxu0
        %v1917 = vadd.f32 0.0, %v1916
        %v1918 = vpop.f32.mrf.mxu0
        %v1919 = vadd.f32 0.0, %v1918
        %1920 = vdwg.mxu0
        %v1921 = vadd.f32 %v1784, %v1842
        %v1922 = vadd.f32 %v1785, %v1844
        %v1923 = vadd.f32 %v1786, %v1847
        %v1924 = vadd.f32 %v1787, %v1849
        %v1925 = vadd.f32 %v1788, %v1852
        %v1926 = vadd.f32 %v1789, %v1854
        %v1927 = vadd.f32 %v1790, %v1857
        %v1928 = vadd.f32 %v1791, %v1859
        %v1929 = vadd.f32 %v1792, %v1862
        %v1930 = vadd.f32 %v1793, %v1864
        %v1931 = vadd.f32 %v1794, %v1867
        %v1932 = vadd.f32 %v1795, %v1869
        %v1933 = vadd.f32 %v1796, %v1872
        %v1934 = vadd.f32 %v1797, %v1874
        %v1935 = vadd.f32 %v1798, %v1877
        %v1936 = vadd.f32 %v1799, %v1879
        %v1937 = vadd.f32 %v1800, %v1882
        %v1938 = vadd.f32 %v1801, %v1884
        %v1939 = vadd.f32 %v1802, %v1887
        %v1940 = vadd.f32 %v1803, %v1889
        %v1941 = vadd.f32 %v1804, %v1892
        %v1942 = vadd.f32 %v1805, %v1894
        %v1943 = vadd.f32 %v1806, %v1897
        %v1944 = vadd.f32 %v1807, %v1899
        %v1945 = vadd.f32 %v1808, %v1902
        %v1946 = vadd.f32 %v1809, %v1904
        %v1947 = vadd.f32 %v1810, %v1907
        %v1948 = vadd.f32 %v1811, %v1909
        %v1949 = vadd.f32 %v1812, %v1912
        %v1950 = vadd.f32 %v1813, %v1914
        %v1951 = vadd.f32 %v1814, %v1917
        %v1952 = vadd.f32 %v1815, %v1919
        %v1953 = vmax.f32 %v1921, 0.0
        %v1954 = vmax.f32 %v1922, 0.0
        %v1955 = vmax.f32 %v1923, 0.0
        %v1956 = vmax.f32 %v1924, 0.0
        %v1957 = vmax.f32 %v1925, 0.0
        %v1958 = vmax.f32 %v1926, 0.0
        %v1959 = vmax.f32 %v1927, 0.0
        %v1960 = vmax.f32 %v1928, 0.0
        %v1961 = vmax.f32 %v1929, 0.0
        %v1962 = vmax.f32 %v1930, 0.0
        %v1963 = vmax.f32 %v1931, 0.0
        %v1964 = vmax.f32 %v1932, 0.0
        %v1965 = vmax.f32 %v1933, 0.0
        %v1966 = vmax.f32 %v1934, 0.0
        %v1967 = vmax.f32 %v1935, 0.0
        %v1968 = vmax.f32 %v1936, 0.0
        %v1969 = vmax.f32 %v1937, 0.0
        %v1970 = vmax.f32 %v1938, 0.0
        %v1971 = vmax.f32 %v1939, 0.0
        %v1972 = vmax.f32 %v1940, 0.0
        %v1973 = vmax.f32 %v1941, 0.0
        %v1974 = vmax.f32 %v1942, 0.0
        %v1975 = vmax.f32 %v1943, 0.0
        %v1976 = vmax.f32 %v1944, 0.0
        %v1977 = vmax.f32 %v1945, 0.0
        %v1978 = vmax.f32 %v1946, 0.0
        %v1979 = vmax.f32 %v1947, 0.0
        %v1980 = vmax.f32 %v1948, 0.0
        %v1981 = vmax.f32 %v1949, 0.0
        %v1982 = vmax.f32 %v1950, 0.0
        %v1983 = vmax.f32 %v1951, 0.0
        %v1984 = vmax.f32 %v1952, 0.0
        %v1985 = vadd.f32 %v1953, %v1954
        %v1986 = vadd.f32 %v1985, %v1955
        %v1987 = vadd.f32 %v1986, %v1956
        %v1988 = vadd.f32 %v1987, %v1957
        %v1989 = vadd.f32 %v1988, %v1958
        %v1990 = vadd.f32 %v1989, %v1959
        %v1991 = vadd.f32 %v1990, %v1960
        %v1992 = vadd.f32 %v1991, %v1961
        %v1993 = vadd.f32 %v1992, %v1962
        %v1994 = vadd.f32 %v1993, %v1963
        %v1995 = vadd.f32 %v1994, %v1964
        %v1996 = vadd.f32 %v1995, %v1965
        %v1997 = vadd.f32 %v1996, %v1966
        %v1998 = vadd.f32 %v1997, %v1967
        %v1999 = vadd.f32 %v1998, %v1968
        %v2000 = vadd.f32 %v1999, %v1969
        %v2001 = vadd.f32 %v2000, %v1970
        %v2002 = vadd.f32 %v2001, %v1971
        %v2003 = vadd.f32 %v2002, %v1972
        %v2004 = vadd.f32 %v2003, %v1973
        %v2005 = vadd.f32 %v2004, %v1974
        %v2006 = vadd.f32 %v2005, %v1975
        %v2007 = vadd.f32 %v2006, %v1976
        %v2008 = vadd.f32 %v2007, %v1977
        %v2009 = vadd.f32 %v2008, %v1978
        %v2010 = vadd.f32 %v2009, %v1979
        %v2011 = vadd.f32 %v2010, %v1980
        %v2012 = vadd.f32 %v2011, %v1981
        %v2013 = vadd.f32 %v2012, %v1982
        %v2014 = vadd.f32 %v2013, %v1983
        %v2015 = vadd.f32 %v2014, %v1984
        %v2016 = vrot.slane %v2015, 4
        %v2017 = vadd.f32 %v2015, %v2016
        %v2018 = vrot.slane %v2017, 2
        %v2019 = vadd.f32 %v2017, %v2018
        %v2020 = vrot.slane %v2019, 1
        %v2021 = vadd.f32 %v2019, %v2020
        %v2022 = vmul.f32 %v2021, 0.00390625
        %v2023 = vld [vmem:[%s2] sm:$0xff]
        %v2024 = vld [vmem:[%s2 + $0x8] sm:$0xff]
        %v2025 = vld [vmem:[%s2 + $0x10] sm:$0xff]
        %v2026 = vld [vmem:[%s2 + $0x18] sm:$0xff]
        %v2027 = vld [vmem:[%s2 + $0x20] sm:$0xff]
        %v2028 = vld [vmem:[%s2 + $0x28] sm:$0xff]
        %v2029 = vld [vmem:[%s2 + $0x30] sm:$0xff]
        %v2030 = vld [vmem:[%s2 + $0x38] sm:$0xff]
        %v2031 = vld [vmem:[%s2 + $0x40] sm:$0xff]
        %v2032 = vld [vmem:[%s2 + $0x48] sm:$0xff]
        %v2033 = vld [vmem:[%s2 + $0x50] sm:$0xff]
        %v2034 = vld [vmem:[%s2 + $0x58] sm:$0xff]
        %v2035 = vld [vmem:[%s2 + $0x60] sm:$0xff]
        %v2036 = vld [vmem:[%s2 + $0x68] sm:$0xff]
        %v2037 = vld [vmem:[%s2 + $0x70] sm:$0xff]
        %v2038 = vld [vmem:[%s2 + $0x78] sm:$0xff]
        %v2039 = vld [vmem:[%s2 + $0x80] sm:$0xff]
        %v2040 = vld [vmem:[%s2 + $0x88] sm:$0xff]
        %v2041 = vld [vmem:[%s2 + $0x90] sm:$0xff]
        %v2042 = vld [vmem:[%s2 + $0x98] sm:$0xff]
        %v2043 = vld [vmem:[%s2 + $0xa0] sm:$0xff]
        %v2044 = vld [vmem:[%s2 + $0xa8] sm:$0xff]
        %v2045 = vld [vmem:[%s2 + $0xb0] sm:$0xff]
        %v2046 = vld [vmem:[%s2 + $0xb8] sm:$0xff]
        %v2047 = vld [vmem:[%s2 + $0xc0] sm:$0xff]
        %v2048 = vld [vmem:[%s2 + $0xc8] sm:$0xff]
        %v2049 = vld [vmem:[%s2 + $0xd0] sm:$0xff]
        %v2050 = vld [vmem:[%s2 + $0xd8] sm:$0xff]
        %v2051 = vld [vmem:[%s2 + $0xe0] sm:$0xff]
        %v2052 = vld [vmem:[%s2 + $0xe8] sm:$0xff]
        %v2053 = vld [vmem:[%s2 + $0xf0] sm:$0xff]
        %v2054 = vld [vmem:[%s2 + $0xf8] sm:$0xff]
        %v2055 = vld [vmem:[%s3] sm:$0x3]
        %v2057 = vperm.slane %v2055, 0
        %v2058 = vperm.slane %v2055, 1
        %2061 = vmatpush.msra.mxu0 %v2053
        %2062 = vmatpush.msra.mxu0 %v2051
        %2063 = vmatpush.msra.mxu0 %v2049
        %2064 = vmatpush.msra.mxu0 %v2047
        %2065 = vmatpush.msra.mxu0 %v2045
        %2066 = vmatpush.msra.mxu0 %v2043
        %2067 = vmatpush.msra.mxu0 %v2041
        %2068 = vmatpush.msra.mxu0 %v2039
        %2069 = vmatpush.msra.mxu0 %v2037
        %2070 = vmatpush.msra.mxu0 %v2035
        %2071 = vmatpush.msra.mxu0 %v2033
        %2072 = vmatpush.msra.mxu0 %v2031
        %2073 = vmatpush.msra.mxu0 %v2029
        %2074 = vmatpush.msra.mxu0 %v2027
        %2075 = vmatpush.msra.mxu0 %v2025
        %2076 = vmatpush.msra.mxu0 %v2023
        %2077 = vmatmul.f32.gmra.mxu0 %v2022
        %v2078 = vpop.f32.mrf.mxu0
        %v2079 = vadd.f32 %v2057, %v2078
        %2080 = vdwg.mxu0
        %2081 = vmatpush.msra.mxu0 %v2054
        %2082 = vmatpush.msra.mxu0 %v2052
        %2083 = vmatpush.msra.mxu0 %v2050
        %2084 = vmatpush.msra.mxu0 %v2048
        %2085 = vmatpush.msra.mxu0 %v2046
        %2086 = vmatpush.msra.mxu0 %v2044
        %2087 = vmatpush.msra.mxu0 %v2042
        %2088 = vmatpush.msra.mxu0 %v2040
        %2089 = vmatpush.msra.mxu0 %v2038
        %2090 = vmatpush.msra.mxu0 %v2036
        %2091 = vmatpush.msra.mxu0 %v2034
        %2092 = vmatpush.msra.mxu0 %v2032
        %2093 = vmatpush.msra.mxu0 %v2030
        %2094 = vmatpush.msra.mxu0 %v2028
        %2095 = vmatpush.msra.mxu0 %v2026
        %2096 = vmatpush.msra.mxu0 %v2024
        %2097 = vmatmul.f32.gmra.mxu0 %v2022
        %v2098 = vpop.f32.mrf.mxu0
        %v2099 = vadd.f32 %v2058, %v2098
        %2100 = vdwg.mxu0
        %v2101 = vmax.f32 %v2079, 0.0
        %v2102 = vmax.f32 %v2099, 0.0
        %v2103 = vld [vmem:[%s4] sm:$0xff]
        %v2104 = vld [vmem:[%s4 + $0x8] sm:$0xff]
        %v2105 = vld [vmem:[%s4 + $0x10] sm:$0xff]
        %v2106 = vld [vmem:[%s4 + $0x18] sm:$0xff]
        %v2107 = vld [vmem:[%s4 + $0x20] sm:$0xff]
        %v2108 = vld [vmem:[%s4 + $0x28] sm:$0xff]
        %v2109 = vld [vmem:[%s4 + $0x30] sm:$0xff]
        %v2110 = vld [vmem:[%s4 + $0x38] sm:$0xff]
        %v2111 = vld [vmem:[%s4 + $0x40] sm:$0xff]
        %v2112 = vld [vmem:[%s4 + $0x48] sm:$0xff]
        %v2113 = vld [vmem:[%s4 + $0x50] sm:$0xff]
        %v2114 = vld [vmem:[%s4 + $0x58] sm:$0xff]
        %v2115 = vld [vmem:[%s4 + $0x60] sm:$0xff]
        %v2116 = vld [vmem:[%s4 + $0x68] sm:$0xff]
        %v2117 = vld [vmem:[%s4 + $0x70] sm:$0xff]
        %v2118 = vld [vmem:[%s4 + $0x78] sm:$0xff]
        %v2119 = vld [vmem:[%s4 + $0x80] sm:$0xff]
        %v2120 = vld [vmem:[%s4 + $0x88] sm:$0xff]
        %v2121 = vld [vmem:[%s4 + $0x90] sm:$0xff]
        %v2122 = vld [vmem:[%s4 + $0x98] sm:$0xff]
        %v2123 = vld [vmem:[%s4 + $0xa0] sm:$0xff]
        %v2124 = vld [vmem:[%s4 + $0xa8] sm:$0xff]
        %v2125 = vld [vmem:[%s4 + $0xb0] sm:$0xff]
        %v2126 = vld [vmem:[%s4 + $0xb8] sm:$0xff]
        %v2127 = vld [vmem:[%s4 + $0xc0] sm:$0xff]
        %v2128 = vld [vmem:[%s4 + $0xc8] sm:$0xff]
        %v2129 = vld [vmem:[%s4 + $0xd0] sm:$0xff]
        %v2130 = vld [vmem:[%s4 + $0xd8] sm:$0xff]
        %v2131 = vld [vmem:[%s4 + $0xe0] sm:$0xff]
        %v2132 = vld [vmem:[%s4 + $0xe8] sm:$0xff]
        %v2133 = vld [vmem:[%s4 + $0xf0] sm:$0xff]
        %v2134 = vld [vmem:[%s4 + $0xf8] sm:$0xff]
        %v2135 = vld [vmem:[%s5] sm:$0x1]
        %2136 = vmatpush.msra.mxu0 %v2118
        %2137 = vmatpush.msra.mxu0 %v2117
        %2138 = vmatpush.msra.mxu0 %v2116
        %2139 = vmatpush.msra.mxu0 %v2115
        %2140 = vmatpush.msra.mxu0 %v2114
        %2141 = vmatpush.msra.mxu0 %v2113
        %2142 = vmatpush.msra.mxu0 %v2112
        %2143 = vmatpush.msra.mxu0 %v2111
        %2144 = vmatpush.msra.mxu0 %v2110
        %2145 = vmatpush.msra.mxu0 %v2109
        %2146 = vmatpush.msra.mxu0 %v2108
        %2147 = vmatpush.msra.mxu0 %v2107
        %2148 = vmatpush.msra.mxu0 %v2106
        %2149 = vmatpush.msra.mxu0 %v2105
        %2150 = vmatpush.msra.mxu0 %v2104
        %2151 = vmatpush.msra.mxu0 %v2103
        %2152 = vmatmul.f32.gmra.mxu0 %v2101
        %v2153 = vpop.f32.mrf.mxu0
        %v2154 = vadd.f32 %v2135, %v2153
        %2155 = vdwg.mxu0
        %2156 = vmatpush.msra.mxu0 %v2134
        %2157 = vmatpush.msra.mxu0 %v2133
        %2158 = vmatpush.msra.mxu0 %v2132
        %2159 = vmatpush.msra.mxu0 %v2131
        %2160 = vmatpush.msra.mxu0 %v2130
        %2161 = vmatpush.msra.mxu0 %v2129
        %2162 = vmatpush.msra.mxu0 %v2128
        %2163 = vmatpush.msra.mxu0 %v2127
        %2164 = vmatpush.msra.mxu0 %v2126
        %2165 = vmatpush.msra.mxu0 %v2125
        %2166 = vmatpush.msra.mxu0 %v2124
        %2167 = vmatpush.msra.mxu0 %v2123
        %2168 = vmatpush.msra.mxu0 %v2122
        %2169 = vmatpush.msra.mxu0 %v2121
        %2170 = vmatpush.msra.mxu0 %v2120
        %2171 = vmatpush.msra.mxu0 %v2119
        %2172 = vmatmul.f32.gmra.mxu0 %v2102
        %v2173 = vpop.f32.mrf.mxu0
        %v2174 = vadd.f32 %v2154, %v2173
        %2175 = vdwg.mxu0
        %vm2176 = vcmask 8192
        %v2177 = vsel %vm2176, %v2174, -inf
        %2178 = vmax.xlane.f32.xlu0 %v2177
        %v2179 = vpop.xlane.xlu0 %2178
        %v2180 = vsub.f32 %v2174, %v2179
        %v2181 = vmul.f32 %v2180, 1.442695
        %v2182 = vpow.pop %v2181
        %v2183 = vsel %vm2176, %v2182, 0.0
        %2184 = vadd.xlane.f32.xlu0 %v2183
        %v2185 = vpop.xlane.xlu0 %2184
        %v2186 = vlog2.pop %v2185
        %v2187 = vmul.f32 %v2186, 0.6931472
        %v2188 = vsub.f32 %v2180, %v2187
        %2189 = vst.msk [vmem:[%s243] sm:$0x1] %vm2176, %v2188
        %s2190 = sand.u32 %s159, 1
        %s2191 = scalar_lea.sflag [#allocation3], %s2190
        %s2192 = sand.u32 %s159, 1
        %s2193 = scalar_lea.vmem [#allocation2], %s2192
        // Predicated region
        $region45: #{resnet_pre_net_forward.1} parent=43 // pred_check
          %p2194 = pneg %p169
        $region46: #{resnet_pre_net_forward.1} parent=43 // pred_check_branch
          %2196 = sbr.rel (%p2194) target = $region48
        $region47: #{resnet_pre_net_forward.1} parent=43 // pred_region
          %2198 = vsyncadd %s2191, 0
          %s2199 = scalar_lea.hbm %s6, %s20
          %s2201 = sshll.u32 %s2193, 4
          %s2202 = int_to_ptr.vmem [resolvable:$true] %s2201
          %s2203 = sshll.u32 %s2199, 4
          %s2204 = int_to_ptr.hbm [resolvable:$true] %s2203
          %2206 = dma.vmem_to_hbm [thread:$0]  %s2202, 16, %s2204, %s2191
        $region48: #{resnet_pre_net_forward.1} parent=43 // pred_fallthru
          _
      $region44: #{resnet_pre_net_forward.1} parent=5 // pred_fallthru
        _
      %p2207 = scmp.le.s32.totalorder 2, %s15
      // Predicated region
      $region49: #{resnet_pre_net_forward.1} parent=5 // pred_check
        %p2208 = pneg %p2207
      $region50: #{resnet_pre_net_forward.1} parent=5 // pred_check_branch
        %2210 = sbr.rel (%p2208) target = $region52
      $region51: #{resnet_pre_net_forward.1} parent=5 // pred_region
        %s2211 = ssub.s32 %s15, 2
        // Predicated region
        $region53: #{resnet_pre_net_forward.1} parent=51 // pred_check
          %p2212 = pneg %p175
        $region54: #{resnet_pre_net_forward.1} parent=51 // pred_check_branch
          %2214 = sbr.rel (%p2212) target = $region56
        $region55: #{resnet_pre_net_forward.1} parent=51 // pred_region
          %s2215 = sand.u32 %s160, 1
          %s2216 = scalar_lea.sflag [#allocation3], %s2215
          %s2217 = sand.u32 %s160, 1
          %s2218 = scalar_lea.vmem [#allocation2], %s2217
          %2220 = dma.done %s2216, 16
        $region56: #{resnet_pre_net_forward.1} parent=51 // pred_fallthru
          _
      $region52: #{resnet_pre_net_forward.1} parent=5 // pred_fallthru
        _
    $region6: #{resnet_pre_net_forward.1} parent=1 // loop_footer
      %s19 = sadd.s32 1, %s15
    $region7: #{resnet_pre_net_forward.1} parent=1 // loop_footer_branch
      %14 = sbr.rel target = $region3
    $region8: #{resnet_pre_net_forward.1} parent=1 // loop_exit
      _
    %2221 = vsyncpa [#allocation3], 1
    %s2222 = scalar_lea.sflag [#allocation3], 1
    %2223 = vsyncpa %s2222, 1

</llo_original>
